<compile_context>
chip_gen: v7x
topology: tpu7x:2x2x1
jax: 0.10.0
libtpu: 0.0.40
codegen_flags: <defaults>
</compile_context>

<pallas_src>
import jax
import jax.numpy as jnp
from jax.experimental import pallas as pl
from jax.experimental.pallas import tpu as pltpu


def soft_dot_attention_kernel(h_ref, ctx_ref, win_ref, wout_c_ref, wout_h_ref,
                              ht_ref, attn_ref):
    h = h_ref[...].astype(jnp.float32)            # (TB, D)
    ctx = ctx_ref[...].astype(jnp.float32)        # (TB, S, D)

    # target = linear_in(h)                         (TB, D)  -- MXU
    target = jnp.dot(h, win_ref[...], preferred_element_type=jnp.float32)

    # attn scores = bmm(context, target[..., None]).squeeze(-1)      (TB, S)
    # Batched MXU contraction over D; avoids materializing a (TB, S, D) temp.
    scores = jnp.einsum(
        "bqd,bkd->bqk", target[:, None, :], ctx,
        preferred_element_type=jnp.float32)[:, 0, :]                # (TB, S)

    # softmax over the sequence axis (torch dim=1), f32 math throughout.
    # Exact divide for the denominator (the approx EUP reciprocal cost 2e-3 accuracy).
    m = jnp.max(scores, axis=-1, keepdims=True)
    e = jnp.exp(scores - m)
    denom = jnp.sum(e, axis=-1, keepdims=True)
    attn = e / denom                                                # (TB, S)

    # weighted_context = bmm(attn[:, None, :], context).squeeze(1)   (TB, D)
    wc = jnp.einsum(
        "bqk,bkd->bqd", attn[:, None, :], ctx,
        preferred_element_type=jnp.float32)[:, 0, :]                # (TB, D)

    # h_tilde = tanh(linear_out(cat([wc, h], -1)))
    #         = tanh(wc @ W_out^T[:D] + h @ W_out^T[D:])  -- two resident (D,D) halves,
    # no in-kernel lane concatenate needed.
    ht = jnp.tanh(
        jnp.dot(wc, wout_c_ref[...], preferred_element_type=jnp.float32)
        + jnp.dot(h, wout_h_ref[...], preferred_element_type=jnp.float32))

    ht_ref[...] = ht.astype(ht_ref.dtype)

    # Lane-dense attn store: pad the tail with exact zeros up to the out width (mult. of 128).
    pad = attn_ref.shape[-1] - attn.shape[-1]
    if pad:
        attn = jnp.concatenate(
            [attn, jnp.zeros((attn.shape[0], pad), attn.dtype)], axis=-1)
    attn_ref[...] = attn.astype(attn_ref.dtype)


def prepare_weights(w_in, w_out):
    """Pre-transpose / split torch-layout weights ONCE (parameter-load time).
    w_in: (D, D), w_out: (D, 2D) in torch (out, in) layout.
    Returns W_in^T (D, D), W_out^T[:D] (D, D) [wc half], W_out^T[D:] (D, D) [h half]."""
    D = w_in.shape[0]
    w_in_t = jnp.asarray(w_in).T
    w_out_t = jnp.asarray(w_out).T                 # (2D, D)
    return w_in_t, w_out_t[:D, :], w_out_t[D:, :]


def _pick_block_b(B, S, D, itemsize=4, ctx_tile_budget=6 << 20):
    """Largest batch tile that divides B, keeps the context tile under the VMEM
    budget (double-buffered by the pipeline), and is sublane-friendly."""
    for tb in (512, 256, 128, 64, 32, 16, 8):
        if B % tb == 0 and tb * S * D * itemsize <= ctx_tile_budget:
            return tb
    return B  # tiny/awkward batch: single full-batch block (always legal)


def soft_dot_attention(h, context, w_in_t, w_out_c_t, w_out_h_t, *, block_b=None):
    """h: (B, D), context: (B, S, D), w_in_t: (D, D), w_out_c_t/w_out_h_t: (D, D).
    Returns (h_tilde (B, D), attn (B, S))."""
    B, D = h.shape
    Bc, S, Dc = context.shape
    assert (Bc, Dc) == (B, D)
    assert w_in_t.shape == (D, D)
    assert w_out_c_t.shape == (D, D) and w_out_h_t.shape == (D, D)

    TB = block_b if block_b is not None else _pick_block_b(B, S, D)
    if B % TB != 0 or (TB % 8 != 0 and TB != B):
        TB = B  # fallback: one full-batch block
    nb = B // TB

    # Lane-dense attn output: stored last dim is a multiple of 128; sliced back below.
    S_PAD = max(128, ((S + 127) // 128) * 128)

    out_shapes = (
        jax.ShapeDtypeStruct((B, D), jnp.float32),
        jax.ShapeDtypeStruct((B, S_PAD), jnp.float32),
    )

    h_tilde, attn_padded = pl.pallas_call(
        soft_dot_attention_kernel,
        out_shape=out_shapes,
        grid=(nb,),
        in_specs=[
            pl.BlockSpec((TB, D), lambda i: (i, 0)),        # h            : batch tile
            pl.BlockSpec((TB, S, D), lambda i: (i, 0, 0)),  # context      : batch tile (pipelined)
            pl.BlockSpec((D, D), lambda i: (0, 0)),         # W_in^T       : resident across steps
            pl.BlockSpec((D, D), lambda i: (0, 0)),         # W_out^T[:D]  : resident across steps
            pl.BlockSpec((D, D), lambda i: (0, 0)),         # W_out^T[D:]  : resident across steps
        ],
        out_specs=(
            pl.BlockSpec((TB, D), lambda i: (i, 0)),
            pl.BlockSpec((TB, S_PAD), lambda i: (i, 0)),
        ),
        compiler_params=pltpu.CompilerParams(
            dimension_semantics=("parallel",),              # megacore-shardable batch axis
            vmem_limit_bytes=48 * 1024 * 1024,              # under v7x 64 MiB physical
        ),
    )(h, context, w_in_t, w_out_c_t, w_out_h_t)

    attn = attn_padded[:, :S] if S_PAD != S else attn_padded
    return h_tilde, attn


def _reference(h, context, w_in, w_out):
    target = h @ w_in.T
    scores = jnp.einsum("bsd,bd->bs", context, target)
    attn = jax.nn.softmax(scores, axis=1)
    wc = jnp.einsum("bs,bsd->bd", attn, context)
    h_tilde = jnp.tanh(jnp.concatenate([wc, h], axis=1) @ w_out.T)
    return h_tilde, attn


if __name__ == "__main__":
    B, S, D = 16, 8, 32

    key = jax.random.PRNGKey(0)
    k_h, k_c, k_wi, k_wo = jax.random.split(key, 4)

    h = jax.random.normal(k_h, (B, D), dtype=jnp.float32)
    context = jax.random.normal(k_c, (B, S, D), dtype=jnp.float32)
    # torch Linear weight layout: (out_features, in_features).
    w_in = jax.random.normal(k_wi, (D, D), dtype=jnp.float32) * 0.1
    w_out = jax.random.normal(k_wo, (D, 2 * D), dtype=jnp.float32) * 0.1

    # Transpose / split weights ONCE, outside the per-call path.
    w_in_t, w_out_c_t, w_out_h_t = prepare_weights(w_in, w_out)

    # block_b=8 forces a 2-step batch grid at this toy size so the tiled/pipelined
    # path (batch-tiled context DMA + resident weights) is actually exercised.
    # Leave block_b=None in real use to auto-pick the largest tile fitting VMEM.
    h_tilde, attn = soft_dot_attention(
        h, context, w_in_t, w_out_c_t, w_out_h_t, block_b=8)
    jax.block_until_ready((h_tilde, attn))

    ht_ref, attn_ref = _reference(h, context, w_in, w_out)
    # Exact f32 math in the kernel -> only rounding-level differences remain.
    assert jnp.allclose(attn, attn_ref, atol=1e-3, rtol=1e-3), \
        float(jnp.max(jnp.abs(attn - attn_ref)))
    assert jnp.allclose(h_tilde, ht_ref, atol=1e-3, rtol=1e-3), \
        float(jnp.max(jnp.abs(h_tilde - ht_ref)))

    print("KERNEL_OK")
</pallas_src>

<mosaic_0001>
module attributes {stable_mosaic.version = 11 : i64} {
  func.func @soft_dot_attention_kernel(%arg0: i32, %arg1: memref<8x32xf32, #tpu.memory_space<vmem>>, %arg2: memref<8x8x32xf32, #tpu.memory_space<vmem>>, %arg3: memref<32x32xf32, #tpu.memory_space<vmem>>, %arg4: memref<32x32xf32, #tpu.memory_space<vmem>>, %arg5: memref<32x32xf32, #tpu.memory_space<vmem>>, %arg6: memref<8x32xf32, #tpu.memory_space<vmem>>, %arg7: memref<8x128xf32, #tpu.memory_space<vmem>>) attributes {dimension_semantics = [#tpu.dimension_semantics<parallel>], iteration_bounds = array<i64: 2>, scalar_prefetch = 0 : i64, scratch_operands = 0 : i64, tpu.core_type = #tpu.core_type<tc>, window_params = [{transform_indices = @transform_0, window_bounds = array<i64: 8, 32>}, {transform_indices = @transform_1, window_bounds = array<i64: 8, 8, 32>}, {pipeline_mode = #tpu.pipeline_mode<synchronous>, transform_indices = @transform_2, window_bounds = array<i64: 32, 32>}, {pipeline_mode = #tpu.pipeline_mode<synchronous>, transform_indices = @transform_3, window_bounds = array<i64: 32, 32>}, {pipeline_mode = #tpu.pipeline_mode<synchronous>, transform_indices = @transform_4, window_bounds = array<i64: 32, 32>}, {transform_indices = @transform_5, window_bounds = array<i64: 8, 32>}, {transform_indices = @transform_6, window_bounds = array<i64: 8, 128>}]} {
    %c0 = arith.constant 0 : index
    %c0_0 = arith.constant 0 : index
    %0 = vector.load %arg1[%c0, %c0_0] : memref<8x32xf32, #tpu.memory_space<vmem>>, vector<8x32xf32>
    %c0_1 = arith.constant 0 : index
    %c0_2 = arith.constant 0 : index
    %c0_3 = arith.constant 0 : index
    %1 = vector.load %arg2[%c0_1, %c0_2, %c0_3] : memref<8x8x32xf32, #tpu.memory_space<vmem>>, vector<8x8x32xf32>
    %c0_4 = arith.constant 0 : index
    %c0_5 = arith.constant 0 : index
    %2 = vector.load %arg3[%c0_4, %c0_5] : memref<32x32xf32, #tpu.memory_space<vmem>>, vector<32x32xf32>
    %cst = arith.constant dense<0.000000e+00> : vector<8x32xf32>
    %3 = tpu.matmul %0, %2, %cst {dimension_numbers = #tpu.dot_dimension_numbers<[1], [0], [0], [1], [0, 0, 1, 1], [], []>} : vector<8x32xf32>, vector<32x32xf32>, vector<8x32xf32> -> vector<8x32xf32>
    %4 = vector.shape_cast %3 : vector<8x32xf32> to vector<8x1x32xf32>
    "tpu.trace_start"() <{level = 10 : i32, message = "bqd,bkd->bqk"}> : () -> ()
    %cst_6 = arith.constant dense<0.000000e+00> : vector<8x1x8xf32>
    %5 = tpu.matmul %4, %1, %cst_6 {dimension_numbers = #tpu.dot_dimension_numbers<[2], [2], [1], [1], [0, 0, 0, 1, 1, 1], [0], [0]>} : vector<8x1x32xf32>, vector<8x8x32xf32>, vector<8x1x8xf32> -> vector<8x1x8xf32>
    "tpu.trace_stop"() : () -> ()
    %6 = vector.shape_cast %5 : vector<8x1x8xf32> to vector<8x8xf32>
    %cst_7 = arith.constant dense<0xFF800000> : vector<8xf32>
    %7 = vector.multi_reduction <maximumf>, %6, %cst_7 [1] : vector<8x8xf32> to vector<8xf32>
    %8 = vector.shape_cast %7 : vector<8xf32> to vector<8x1xf32>
    %9 = vector.broadcast %8 : vector<8x1xf32> to vector<8x8xf32>
    %10 = arith.subf %6, %9 : vector<8x8xf32>
    %11 = math.exp %10 : vector<8x8xf32>
    %cst_8 = arith.constant dense<0.000000e+00> : vector<8xf32>
    %12 = vector.multi_reduction <add>, %11, %cst_8 [1] : vector<8x8xf32> to vector<8xf32>
    %13 = vector.shape_cast %12 : vector<8xf32> to vector<8x1xf32>
    %14 = vector.broadcast %13 : vector<8x1xf32> to vector<8x8xf32>
    %15 = arith.divf %11, %14 : vector<8x8xf32>
    %16 = vector.shape_cast %15 : vector<8x8xf32> to vector<8x1x8xf32>
    "tpu.trace_start"() <{level = 10 : i32, message = "bqk,bkd->bqd"}> : () -> ()
    %cst_9 = arith.constant dense<0.000000e+00> : vector<8x1x32xf32>
    %17 = tpu.matmul %16, %1, %cst_9 {dimension_numbers = #tpu.dot_dimension_numbers<[2], [1], [1], [2], [0, 0, 0, 1, 1, 2], [0], [0]>} : vector<8x1x8xf32>, vector<8x8x32xf32>, vector<8x1x32xf32> -> vector<8x1x32xf32>
    "tpu.trace_stop"() : () -> ()
    %18 = vector.shape_cast %17 : vector<8x1x32xf32> to vector<8x32xf32>
    %c0_10 = arith.constant 0 : index
    %c0_11 = arith.constant 0 : index
    %19 = vector.load %arg4[%c0_10, %c0_11] : memref<32x32xf32, #tpu.memory_space<vmem>>, vector<32x32xf32>
    %cst_12 = arith.constant dense<0.000000e+00> : vector<8x32xf32>
    %20 = tpu.matmul %18, %19, %cst_12 {dimension_numbers = #tpu.dot_dimension_numbers<[1], [0], [0], [1], [0, 0, 1, 1], [], []>} : vector<8x32xf32>, vector<32x32xf32>, vector<8x32xf32> -> vector<8x32xf32>
    %c0_13 = arith.constant 0 : index
    %c0_14 = arith.constant 0 : index
    %21 = vector.load %arg5[%c0_13, %c0_14] : memref<32x32xf32, #tpu.memory_space<vmem>>, vector<32x32xf32>
    %cst_15 = arith.constant dense<0.000000e+00> : vector<8x32xf32>
    %22 = tpu.matmul %0, %21, %cst_15 {dimension_numbers = #tpu.dot_dimension_numbers<[1], [0], [0], [1], [0, 0, 1, 1], [], []>} : vector<8x32xf32>, vector<32x32xf32>, vector<8x32xf32> -> vector<8x32xf32>
    %23 = arith.addf %20, %22 : vector<8x32xf32>
    %24 = math.tanh %23 : vector<8x32xf32>
    %c0_16 = arith.constant 0 : index
    %c0_17 = arith.constant 0 : index
    %25 = vector.load %arg6[%c0_16, %c0_17] : memref<8x32xf32, #tpu.memory_space<vmem>>, vector<8x32xf32>
    tpu.vector_store %arg6[%c0_16, %c0_17], %24 {strides = array<i32>} : memref<8x32xf32, #tpu.memory_space<vmem>>, vector<8x32xf32>,
    %cst_18 = arith.constant 0.000000e+00 : f32
    %26 = vector.broadcast %cst_18 : f32 to vector<8x120xf32>
    %27 = tpu.concatenate %15, %26 in 1 : vector<8x8xf32>, vector<8x120xf32> -> vector<8x128xf32>
    %c0_19 = arith.constant 0 : index
    %c0_20 = arith.constant 0 : index
    %28 = vector.load %arg7[%c0_19, %c0_20] : memref<8x128xf32, #tpu.memory_space<vmem>>, vector<8x128xf32>
    tpu.vector_store %arg7[%c0_19, %c0_20], %27 {strides = array<i32>} : memref<8x128xf32, #tpu.memory_space<vmem>>, vector<8x128xf32>,
    return
  }
  func.func @transform_0(%arg0: i32) -> (i32, i32) {
    %c0_i32 = arith.constant 0 : i32
    %c0_i32_0 = arith.constant 0 : i32
    return %arg0, %c0_i32 : i32, i32
  }
  func.func @transform_1(%arg0: i32) -> (i32, i32, i32) {
    %c0_i32 = arith.constant 0 : i32
    %c0_i32_0 = arith.constant 0 : i32
    %c0_i32_1 = arith.constant 0 : i32
    return %arg0, %c0_i32, %c0_i32_0 : i32, i32, i32
  }
  func.func @transform_2(%arg0: i32) -> (i32, i32) {
    %c0_i32 = arith.constant 0 : i32
    %c0_i32_0 = arith.constant 0 : i32
    %c0_i32_1 = arith.constant 0 : i32
    return %c0_i32, %c0_i32_0 : i32, i32
  }
  func.func @transform_3(%arg0: i32) -> (i32, i32) {
    %c0_i32 = arith.constant 0 : i32
    %c0_i32_0 = arith.constant 0 : i32
    %c0_i32_1 = arith.constant 0 : i32
    return %c0_i32, %c0_i32_0 : i32, i32
  }
  func.func @transform_4(%arg0: i32) -> (i32, i32) {
    %c0_i32 = arith.constant 0 : i32
    %c0_i32_0 = arith.constant 0 : i32
    %c0_i32_1 = arith.constant 0 : i32
    return %c0_i32, %c0_i32_0 : i32, i32
  }
  func.func @transform_5(%arg0: i32) -> (i32, i32) {
    %c0_i32 = arith.constant 0 : i32
    %c0_i32_0 = arith.constant 0 : i32
    return %arg0, %c0_i32 : i32, i32
  }
  func.func @transform_6(%arg0: i32) -> (i32, i32) {
    %c0_i32 = arith.constant 0 : i32
    %c0_i32_0 = arith.constant 0 : i32
    return %arg0, %c0_i32 : i32, i32
  }
}

</mosaic_0001>

<llo_original>
// kernel: tpu_custom_call.1
$region0: #{tpu_custom_call.1}
  #allocation0 [shape = 'u32[]', space=smem, size = 0x4, offset = 0x4, fixed_abs, tag = 'smem constant byte address 0x4 - core index']
  #allocation1 [shape = 'u32[144,128]{1,0:T(1,128)}', space=vmem, size = 0x12000, scoped, tag = 'internal scratch']
  %s0 = inlined_call_operand.hbm [shape: f32[16,32], index: 0, kind: input, shape index: {}]
  %s1 = inlined_call_operand.hbm [shape: f32[16,8,32], index: 1, kind: input, shape index: {}]
  %s2 = inlined_call_operand.hbm [shape: f32[32,32], index: 2, kind: input, shape index: {}]
  %s3 = inlined_call_operand.hbm [shape: f32[32,32], index: 3, kind: input, shape index: {}]
  %s4 = inlined_call_operand.hbm [shape: f32[32,32], index: 4, kind: input, shape index: {}]
  %s5 = inlined_call_operand.hbm [shape: f32[16,32], index: 5, kind: output, shape index: {0}]
  %s6 = inlined_call_operand.hbm [shape: f32[16,128], index: 6, kind: output, shape index: {1}]
  %7 = xla_tuple %s5, %s6
  %s8 = sld [smem:[#allocation0]]
  $region81: #{tpu_custom_call.1} parent=0
    _
  %s10 = ssub.s32 1, %s8
  %s11 = scalar_select 0, %s10, %s8
  $region1: #{tpu_custom_call.1} parent=0
    #allocation2 [shape = 'u8[8192]{0}', space=vmem, size = 0x2000, scoped, tag = 'input window, operand 0']
    #allocation3 [shape = 's32[2]{0}', space=sflag, size = 0x8, scoped, tag = 'scoped memory for tpu_custom_call.1']
    #allocation4 [shape = 's32[2]{0}', space=sflag, size = 0x8, scoped, tag = 'scoped memory for tpu_custom_call.1']
    #allocation5 [shape = 'u8[65536]{0}', space=vmem, size = 0x10000, scoped, tag = 'input window, operand 1']
    #allocation6 [shape = 's32[2]{0}', space=sflag, size = 0x8, scoped, tag = 'scoped memory for tpu_custom_call.1']
    #allocation7 [shape = 'u8[16384]{0}', space=vmem, size = 0x4000, scoped, tag = 'input window, operand 2, single buffered']
    #allocation8 [shape = 'u8[16384]{0}', space=vmem, size = 0x4000, scoped, tag = 'input window, operand 3, single buffered']
    #allocation9 [shape = 's32[1]{0}', space=sflag, size = 0x4, scoped, tag = 'scoped memory for tpu_custom_call.1']
    #allocation10 [shape = 'u8[16384]{0}', space=vmem, size = 0x4000, scoped, tag = 'input window, operand 4, single buffered']
    #allocation11 [shape = 'u8[8192]{0}', space=vmem, size = 0x2000, scoped, tag = 'output window, operand 0']
    #allocation12 [shape = 'u8[8192]{0}', space=vmem, size = 0x2000, scoped, tag = 'output window, operand 1']
    #allocation13 [shape = 's32[2]{0}', space=sflag, size = 0x8, scoped, tag = 'scoped memory for tpu_custom_call.1']
    %12 = vsyncpa [#allocation3], 0
    %s13 = scalar_lea.sflag [#allocation3], 1
    %14 = vsyncpa %s13, 0
    %15 = vsyncpa [#allocation6], 0
    %s16 = scalar_lea.sflag [#allocation6], 1
    %17 = vsyncpa %s16, 0
    %18 = vsyncpa [#allocation9], 0
    %19 = vsyncpa [#allocation4], 0
    %s20 = scalar_lea.sflag [#allocation4], 1
    %21 = vsyncpa %s20, 0
    %22 = vsyncpa [#allocation13], 0
    %s23 = scalar_lea.sflag [#allocation13], 1
    %24 = vsyncpa %s23, 0
    loop: start=0, step=1, limit=4
    $region2: #{tpu_custom_call.1} parent=1 // loop_pre_header
      _
    $region3: #{tpu_custom_call.1} parent=1 // loop_header
      %s26 = sphi 0, %s30
      %p27 = scmp.ge.s32.totalorder %s26, 4
      %s36 = sphi 0, %s38
      %s39 = sphi 0, %s36
      %s40 = sphi 0, %s39
      %s56 = sphi 0, %s40
      %s62 = sphi 0, %s64
      %s65 = sphi 0, %s62
      %s66 = sphi 0, %s65
      %s82 = sphi 0, %s66
      %s86 = sphi 0, %s86
      %s88 = sphi 0, %s86
      %s89 = sphi 0, %s88
      %s103 = sphi 0, %s89
      %s107 = sphi 0, %s107
      %s109 = sphi 0, %s107
      %s110 = sphi 0, %s109
      %s124 = sphi 0, %s110
      %s128 = sphi 0, %s128
      %s130 = sphi 0, %s128
      %s131 = sphi 0, %s130
      %s145 = sphi 0, %s131
      %s151 = sphi 0, %s153
      %s154 = sphi 0, %s151
      %s155 = sphi 0, %s154
      %s171 = sphi 0, %s155
      %s177 = sphi 0, %s179
      %s180 = sphi 0, %s177
      %s181 = sphi 0, %s180
      %s197 = sphi 0, %s181
    $region4: #{tpu_custom_call.1} parent=1 // loop_header_branch
      %29 = sbr.rel (%p27) target = $region8
    $region5: #{tpu_custom_call.1} parent=1 // loop_body
      %s31 = ssub.s32 %s26, 1
      %s32 = ssub.s32 %s26, 2
      %s33 = sadd.s32 %s26, 1
      %s34 = ssub.s32 %s26, %s33
      %p35 = scmp.eq.s32.totalorder %s34, 0
      %s37 = sadd.s32 %s36, 1
      %s38 = scalar_select %p35, %s36, %s37
      %p41 = pneg %p35
      %p42 = scmp.eq.s32.totalorder %s26, 1
      %p43 = por %p41, %p42
      %p44 = scmp.ne.s32.totalorder %s36, %s39
      %p45 = scmp.eq.s32.totalorder %s26, 0
      %p46 = por %p44, %p45
      %p47 = scmp.ne.s32.totalorder %s36, %s39
      %p48 = scmp.eq.s32.totalorder %s31, 1
      %p49 = por %p47, %p48
      %p50 = scmp.ne.s32.totalorder %s39, %s40
      %p51 = scmp.eq.s32.totalorder %s31, 0
      %p52 = por %p50, %p51
      %p53 = scmp.ne.s32.totalorder %s39, %s40
      %p54 = scmp.eq.s32.totalorder %s32, 1
      %p55 = por %p53, %p54
      %p57 = scmp.ne.s32.totalorder %s40, %s56
      %p58 = scmp.eq.s32.totalorder %s32, 0
      %p59 = por %p57, %p58
      %s60 = ssub.s32 %s26, %s33
      %p61 = scmp.eq.s32.totalorder %s60, 0
      %s63 = sadd.s32 %s62, 1
      %s64 = scalar_select %p61, %s62, %s63
      %p67 = pneg %p61
      %p68 = scmp.eq.s32.totalorder %s26, 1
      %p69 = por %p67, %p68
      %p70 = scmp.ne.s32.totalorder %s62, %s65
      %p71 = scmp.eq.s32.totalorder %s26, 0
      %p72 = por %p70, %p71
      %p73 = scmp.ne.s32.totalorder %s62, %s65
      %p74 = scmp.eq.s32.totalorder %s31, 1
      %p75 = por %p73, %p74
      %p76 = scmp.ne.s32.totalorder %s65, %s66
      %p77 = scmp.eq.s32.totalorder %s31, 0
      %p78 = por %p76, %p77
      %p79 = scmp.ne.s32.totalorder %s65, %s66
      %p80 = scmp.eq.s32.totalorder %s32, 1
      %p81 = por %p79, %p80
      %p83 = scmp.ne.s32.totalorder %s66, %s82
      %p84 = scmp.eq.s32.totalorder %s32, 0
      %p85 = por %p83, %p84
      %s87 = sadd.s32 %s86, 1
      %p90 = scmp.eq.s32.totalorder %s26, 1
      %p91 = scmp.ne.s32.totalorder %s86, %s88
      %p92 = scmp.eq.s32.totalorder %s26, 0
      %p93 = por %p91, %p92
      %p94 = scmp.ne.s32.totalorder %s86, %s88
      %p95 = scmp.eq.s32.totalorder %s31, 1
      %p96 = por %p94, %p95
      %p97 = scmp.ne.s32.totalorder %s88, %s89
      %p98 = scmp.eq.s32.totalorder %s31, 0
      %p99 = por %p97, %p98
      %p100 = scmp.ne.s32.totalorder %s88, %s89
      %p101 = scmp.eq.s32.totalorder %s32, 1
      %p102 = por %p100, %p101
      %p104 = scmp.ne.s32.totalorder %s89, %s103
      %p105 = scmp.eq.s32.totalorder %s32, 0
      %p106 = por %p104, %p105
      %s108 = sadd.s32 %s107, 1
      %p111 = scmp.eq.s32.totalorder %s26, 1
      %p112 = scmp.ne.s32.totalorder %s107, %s109
      %p113 = scmp.eq.s32.totalorder %s26, 0
      %p114 = por %p112, %p113
      %p115 = scmp.ne.s32.totalorder %s107, %s109
      %p116 = scmp.eq.s32.totalorder %s31, 1
      %p117 = por %p115, %p116
      %p118 = scmp.ne.s32.totalorder %s109, %s110
      %p119 = scmp.eq.s32.totalorder %s31, 0
      %p120 = por %p118, %p119
      %p121 = scmp.ne.s32.totalorder %s109, %s110
      %p122 = scmp.eq.s32.totalorder %s32, 1
      %p123 = por %p121, %p122
      %p125 = scmp.ne.s32.totalorder %s110, %s124
      %p126 = scmp.eq.s32.totalorder %s32, 0
      %p127 = por %p125, %p126
      %s129 = sadd.s32 %s128, 1
      %p132 = scmp.eq.s32.totalorder %s26, 1
      %p133 = scmp.ne.s32.totalorder %s128, %s130
      %p134 = scmp.eq.s32.totalorder %s26, 0
      %p135 = por %p133, %p134
      %p136 = scmp.ne.s32.totalorder %s128, %s130
      %p137 = scmp.eq.s32.totalorder %s31, 1
      %p138 = por %p136, %p137
      %p139 = scmp.ne.s32.totalorder %s130, %s131
      %p140 = scmp.eq.s32.totalorder %s31, 0
      %p141 = por %p139, %p140
      %p142 = scmp.ne.s32.totalorder %s130, %s131
      %p143 = scmp.eq.s32.totalorder %s32, 1
      %p144 = por %p142, %p143
      %p146 = scmp.ne.s32.totalorder %s131, %s145
      %p147 = scmp.eq.s32.totalorder %s32, 0
      %p148 = por %p146, %p147
      %s149 = ssub.s32 %s26, %s33
      %p150 = scmp.eq.s32.totalorder %s149, 0
      %s152 = sadd.s32 %s151, 1
      %s153 = scalar_select %p150, %s151, %s152
      %p156 = pneg %p150
      %p157 = scmp.eq.s32.totalorder %s26, 1
      %p158 = por %p156, %p157
      %p159 = scmp.ne.s32.totalorder %s151, %s154
      %p160 = scmp.eq.s32.totalorder %s26, 0
      %p161 = por %p159, %p160
      %p162 = scmp.ne.s32.totalorder %s151, %s154
      %p163 = scmp.eq.s32.totalorder %s31, 1
      %p164 = por %p162, %p163
      %p165 = scmp.ne.s32.totalorder %s154, %s155
      %p166 = scmp.eq.s32.totalorder %s31, 0
      %p167 = por %p165, %p166
      %p168 = scmp.ne.s32.totalorder %s154, %s155
      %p169 = scmp.eq.s32.totalorder %s32, 1
      %p170 = por %p168, %p169
      %p172 = scmp.ne.s32.totalorder %s155, %s171
      %p173 = scmp.eq.s32.totalorder %s32, 0
      %p174 = por %p172, %p173
      %s175 = ssub.s32 %s26, %s33
      %p176 = scmp.eq.s32.totalorder %s175, 0
      %s178 = sadd.s32 %s177, 1
      %s179 = scalar_select %p176, %s177, %s178
      %p182 = pneg %p176
      %p183 = scmp.eq.s32.totalorder %s26, 1
      %p184 = por %p182, %p183
      %p185 = scmp.ne.s32.totalorder %s177, %s180
      %p186 = scmp.eq.s32.totalorder %s26, 0
      %p187 = por %p185, %p186
      %p188 = scmp.ne.s32.totalorder %s177, %s180
      %p189 = scmp.eq.s32.totalorder %s31, 1
      %p190 = por %p188, %p189
      %p191 = scmp.ne.s32.totalorder %s180, %s181
      %p192 = scmp.eq.s32.totalorder %s31, 0
      %p193 = por %p191, %p192
      %p194 = scmp.ne.s32.totalorder %s180, %s181
      %p195 = scmp.eq.s32.totalorder %s32, 1
      %p196 = por %p194, %p195
      %p198 = scmp.ne.s32.totalorder %s181, %s197
      %p199 = scmp.eq.s32.totalorder %s32, 0
      %p200 = por %p198, %p199
      %p201 = scmp.le.s32.totalorder 1, %s26
      %p202 = scmp.lt.s32.totalorder %s26, 3
      %p203 = pnand %p201, %p202
      %p204 = pneg %p203
      // Predicated region
      $region9: #{tpu_custom_call.1} parent=5 // pred_check
        _
      $region10: #{tpu_custom_call.1} parent=5 // pred_check_branch
        %206 = sbr.rel (%p203) target = $region12
      $region11: #{tpu_custom_call.1} parent=5 // pred_region
        %s207 = ssub.s32 %s26, 1
        // Predicated region
        $region13: #{tpu_custom_call.1} parent=11 // pred_check
          %p208 = pneg %p99
        $region14: #{tpu_custom_call.1} parent=11 // pred_check_branch
          %210 = sbr.rel (%p208) target = $region16
        $region15: #{tpu_custom_call.1} parent=11 // pred_region
          %s212 = ssub.s32 512, 512
          %213 = vsyncadd [#allocation6], %s212
          %s214 = sshll.u32 [#allocation7], 4
          %s215 = int_to_ptr.vmem [resolvable:$true] %s214
          %220 = dma.hbm_to_vmem [thread:$0]  %s2, 512, %s215, [#allocation6], 128, 128, 8
        $region16: #{tpu_custom_call.1} parent=11 // pred_fallthru
          _
        // Predicated region
        $region17: #{tpu_custom_call.1} parent=11 // pred_check
          %p221 = pneg %p120
        $region18: #{tpu_custom_call.1} parent=11 // pred_check_branch
          %223 = sbr.rel (%p221) target = $region20
        $region19: #{tpu_custom_call.1} parent=11 // pred_region
          %s225 = ssub.s32 512, 512
          %226 = vsyncadd [#allocation9], %s225
          %s227 = sshll.u32 [#allocation8], 4
          %s228 = int_to_ptr.vmem [resolvable:$true] %s227
          %233 = dma.hbm_to_vmem [thread:$0]  %s3, 512, %s228, [#allocation9], 128, 128, 8
        $region20: #{tpu_custom_call.1} parent=11 // pred_fallthru
          _
        // Predicated region
        $region21: #{tpu_custom_call.1} parent=11 // pred_check
          %p234 = pneg %p141
        $region22: #{tpu_custom_call.1} parent=11 // pred_check_branch
          %236 = sbr.rel (%p234) target = $region24
        $region23: #{tpu_custom_call.1} parent=11 // pred_region
          %s238 = ssub.s32 512, 512
          %239 = vsyncadd [#allocation9], %s238
          %s240 = sshll.u32 [#allocation10], 4
          %s241 = int_to_ptr.vmem [resolvable:$true] %s240
          %246 = dma.hbm_to_vmem [thread:$0]  %s4, 512, %s241, [#allocation9], 128, 128, 8
        $region24: #{tpu_custom_call.1} parent=11 // pred_fallthru
          _
      $region12: #{tpu_custom_call.1} parent=5 // pred_fallthru
        _
      %p247 = scmp.lt.s32.totalorder %s26, 2
      // Predicated region
      $region25: #{tpu_custom_call.1} parent=5 // pred_check
        %p248 = pneg %p247
      $region26: #{tpu_custom_call.1} parent=5 // pred_check_branch
        %250 = sbr.rel (%p248) target = $region28
      $region27: #{tpu_custom_call.1} parent=5 // pred_region
        // Predicated region
        $region29: #{tpu_custom_call.1} parent=27 // pred_check
          %p251 = pneg %p46
        $region30: #{tpu_custom_call.1} parent=27 // pred_check_branch
          %253 = sbr.rel (%p251) target = $region32
        $region31: #{tpu_custom_call.1} parent=27 // pred_region
          %s254 = sand.u32 %s36, 1
          %s255 = scalar_lea.sflag [#allocation3], %s254
          %s256 = sand.u32 %s36, 1
          %s257 = smul.addr %s256, 8
          %s258 = scalar_lea.vmem [#allocation2], %s257
          %s260 = ssub.s32 128, 128
          %261 = vsyncadd %s255, %s260
          %s262 = smul.addr %s26, 128
          %s263 = scalar_lea.hbm %s0, %s262
          %s265 = sshll.u32 %s258, 4
          %s266 = int_to_ptr.vmem [resolvable:$true] %s265
          %268 = dma.hbm_to_vmem [thread:$0]  %s263, 128, %s266, %s255
        $region32: #{tpu_custom_call.1} parent=27 // pred_fallthru
          _
        // Predicated region
        $region33: #{tpu_custom_call.1} parent=27 // pred_check
          %p269 = pneg %p72
        $region34: #{tpu_custom_call.1} parent=27 // pred_check_branch
          %271 = sbr.rel (%p269) target = $region36
        $region35: #{tpu_custom_call.1} parent=27 // pred_region
          %s272 = sand.u32 %s26, 1
          %s273 = scalar_lea.sflag [#allocation6], %s272
          %s274 = sand.u32 %s62, 1
          %s275 = smul.addr %s274, 64
          %s276 = scalar_lea.vmem [#allocation5], %s275
          %s277 = smul.u32 8, %s26
          %s279 = ssub.s32 1024, 1024
          %280 = vsyncadd %s273, %s279
          %s281 = smul.addr %s277, 128
          %s282 = scalar_lea.hbm %s1, %s281
          %s283 = sshll.u32 %s276, 4
          %s284 = int_to_ptr.vmem [resolvable:$true] %s283
          %289 = dma.hbm_to_vmem [thread:$0]  %s282, 1024, %s284, %s273, 128, 128, 8
        $region36: #{tpu_custom_call.1} parent=27 // pred_fallthru
          _
      $region28: #{tpu_custom_call.1} parent=5 // pred_fallthru
        _
      %p290 = scmp.le.s32.totalorder 1, %s26
      %p291 = scmp.lt.s32.totalorder %s26, 3
      %p292 = pnand %p290, %p291
      %p293 = pneg %p292
      // Predicated region
      $region37: #{tpu_custom_call.1} parent=5 // pred_check
        _
      $region38: #{tpu_custom_call.1} parent=5 // pred_check_branch
        %295 = sbr.rel (%p292) target = $region40
      $region39: #{tpu_custom_call.1} parent=5 // pred_region
        %s296 = ssub.s32 %s26, 1
        %s297 = sand.u32 %s39, 1
        %s298 = scalar_lea.sflag [#allocation3], %s297
        %s299 = sand.u32 %s39, 1
        %s300 = smul.addr %s299, 8
        %s301 = scalar_lea.vmem [#allocation2], %s300
        // Predicated region
        $region41: #{tpu_custom_call.1} parent=39 // pred_check
          %p302 = pneg %p52
        $region42: #{tpu_custom_call.1} parent=39 // pred_check_branch
          %304 = sbr.rel (%p302) target = $region44
        $region43: #{tpu_custom_call.1} parent=39 // pred_region
          %305 = dma.done %s298, 128
        $region44: #{tpu_custom_call.1} parent=39 // pred_fallthru
          _
        %s306 = sand.u32 %s31, 1
        %s307 = scalar_lea.sflag [#allocation6], %s306
        %s308 = sand.u32 %s65, 1
        %s309 = smul.addr %s308, 64
        %s310 = scalar_lea.vmem [#allocation5], %s309
        // Predicated region
        $region45: #{tpu_custom_call.1} parent=39 // pred_check
          %p311 = pneg %p78
        $region46: #{tpu_custom_call.1} parent=39 // pred_check_branch
          %313 = sbr.rel (%p311) target = $region48
        $region47: #{tpu_custom_call.1} parent=39 // pred_region
          %314 = dma.done %s307, 1024
        $region48: #{tpu_custom_call.1} parent=39 // pred_fallthru
          _
        // Predicated region
        $region49: #{tpu_custom_call.1} parent=39 // pred_check
          %p315 = pneg %p99
        $region50: #{tpu_custom_call.1} parent=39 // pred_check_branch
          %317 = sbr.rel (%p315) target = $region52
        $region51: #{tpu_custom_call.1} parent=39 // pred_region
          %318 = dma.done [#allocation6], 512
        $region52: #{tpu_custom_call.1} parent=39 // pred_fallthru
          _
        // Predicated region
        $region53: #{tpu_custom_call.1} parent=39 // pred_check
          %p319 = pneg %p120
        $region54: #{tpu_custom_call.1} parent=39 // pred_check_branch
          %321 = sbr.rel (%p319) target = $region56
        $region55: #{tpu_custom_call.1} parent=39 // pred_region
          %322 = dma.done [#allocation9], 512
        $region56: #{tpu_custom_call.1} parent=39 // pred_fallthru
          _
        // Predicated region
        $region57: #{tpu_custom_call.1} parent=39 // pred_check
          %p323 = pneg %p141
        $region58: #{tpu_custom_call.1} parent=39 // pred_check_branch
          %325 = sbr.rel (%p323) target = $region60
        $region59: #{tpu_custom_call.1} parent=39 // pred_region
          %326 = dma.done [#allocation9], 512
        $region60: #{tpu_custom_call.1} parent=39 // pred_fallthru
          _
        %s327 = sand.u32 %s39, 1
        %s328 = scalar_lea.sflag [#allocation3], %s327
        %s329 = sand.u32 %s39, 1
        %s330 = smul.addr %s329, 8
        %s331 = scalar_lea.vmem [#allocation2], %s330
        %p332 = pneg %p52
        %p333 = pneg %p49
        %s334 = sand.u32 %s31, 1
        %s335 = scalar_lea.sflag [#allocation6], %s334
        %s336 = sand.u32 %s65, 1
        %s337 = smul.addr %s336, 64
        %s338 = scalar_lea.vmem [#allocation5], %s337
        %p339 = pneg %p78
        %p340 = pneg %p75
        %p341 = pneg %p99
        %p342 = pneg %p96
        %p343 = pneg %p120
        %p344 = pneg %p117
        %p345 = pneg %p141
        %p346 = pneg %p138
        %p347 = pneg %p167
        %p348 = pneg %p164
        %s349 = sand.u32 %s154, 1
        %s350 = scalar_lea.sflag [#allocation4], %s349
        %s351 = sand.u32 %s154, 1
        %s352 = smul.addr %s351, 8
        %s353 = scalar_lea.vmem [#allocation11], %s352
        %p354 = pneg %p193
        %p355 = pneg %p190
        %s356 = sand.u32 %s180, 1
        %s357 = scalar_lea.sflag [#allocation13], %s356
        %s358 = sand.u32 %s180, 1
        %s359 = smul.addr %s358, 8
        %s360 = scalar_lea.vmem [#allocation12], %s359
        %s361 = smul.u32 8, %s31
        %v362 = vld [vmem:[%s301] sm:$0xff]
        %v363 = vld [vmem:[%s310] sm:$0xff]
        %v364 = vld [vmem:[%s310 + $0x8] sm:$0xff]
        %v365 = vld [vmem:[%s310 + $0x10] sm:$0xff]
        %v366 = vld [vmem:[%s310 + $0x18] sm:$0xff]
        %v367 = vld [vmem:[%s310 + $0x20] sm:$0xff]
        %v368 = vld [vmem:[%s310 + $0x28] sm:$0xff]
        %v369 = vld [vmem:[%s310 + $0x30] sm:$0xff]
        %v370 = vld [vmem:[%s310 + $0x38] sm:$0xff]
        %v371 = vld [vmem:[#allocation7] sm:$0xff]
        %v372 = vld [vmem:[#allocation7 + $0x8] sm:$0xff]
        %v373 = vld [vmem:[#allocation7 + $0x10] sm:$0xff]
        %v374 = vld [vmem:[#allocation7 + $0x18] sm:$0xff]
        %vm375 = vcmask 261120
        %v377 = vsel %vm375, %v362, 0
        %379 = vmatprep.subr.mxu0 0.0
        %380 = vmatpush1.msra.mxu0 %v371
        %381 = vmatprep.subr.mxu0 0.0
        %382 = vmatpush1.msra.mxu0 %v372
        %383 = vmatprep.subr.mxu0 0.0
        %384 = vmatpush1.msra.mxu0 %v373
        %385 = vmatprep.subr.mxu0 0.0
        %386 = vmatpush1.msra.mxu0 %v374
        %387 = vmatprep.subr.mxu0 0.0
        %388 = vmatpush1.msra.mxu0 0.0
        %389 = vmatprep.subr.mxu0 0.0
        %390 = vmatpush1.msra.mxu0 0.0
        %391 = vmatprep.subr.mxu0 0.0
        %392 = vmatpush1.msra.mxu0 0.0
        %393 = vmatprep.subr.mxu0 0.0
        %394 = vmatpush1.msra.mxu0 0.0
        %395 = vmatprep.subr.mxu0 0.0
        %396 = vmatpush1.msra.mxu0 0.0
        %397 = vmatprep.subr.mxu0 0.0
        %398 = vmatpush1.msra.mxu0 0.0
        %399 = vmatprep.subr.mxu0 0.0
        %400 = vmatpush1.msra.mxu0 0.0
        %401 = vmatprep.subr.mxu0 0.0
        %402 = vmatpush1.msra.mxu0 0.0
        %403 = vmatprep.subr.mxu0 0.0
        %404 = vmatpush1.msra.mxu0 0.0
        %405 = vmatprep.subr.mxu0 0.0
        %406 = vmatpush1.msra.mxu0 0.0
        %407 = vmatprep.subr.mxu0 0.0
        %408 = vmatpush1.msra.mxu0 0.0
        %409 = vmatprep.subr.mxu0 0.0
        %410 = vmatpush1.msra.mxu0 0.0
        %411 = vmatprep.subr.mxu0 0.0
        %412 = vmatpush1.msra.mxu0 0.0
        %413 = vmatprep.subr.mxu0 0.0
        %414 = vmatpush1.msra.mxu0 0.0
        %415 = vmatprep.subr.mxu0 0.0
        %416 = vmatpush1.msra.mxu0 0.0
        %417 = vmatprep.subr.mxu0 0.0
        %418 = vmatpush1.msra.mxu0 0.0
        %419 = vmatprep.subr.mxu0 0.0
        %420 = vmatpush1.msra.mxu0 0.0
        %421 = vmatprep.subr.mxu0 0.0
        %422 = vmatpush1.msra.mxu0 0.0
        %423 = vmatprep.subr.mxu0 0.0
        %424 = vmatpush1.msra.mxu0 0.0
        %425 = vmatprep.subr.mxu0 0.0
        %426 = vmatpush1.msra.mxu0 0.0
        %427 = vmatprep.subr.mxu0 0.0
        %428 = vmatpush1.msra.mxu0 0.0
        %429 = vmatprep.subr.mxu0 0.0
        %430 = vmatpush1.msra.mxu0 0.0
        %431 = vmatprep.subr.mxu0 0.0
        %432 = vmatpush1.msra.mxu0 0.0
        %433 = vmatprep.subr.mxu0 0.0
        %434 = vmatpush1.msra.mxu0 0.0
        %435 = vmatprep.subr.mxu0 0.0
        %436 = vmatpush1.msra.mxu0 0.0
        %437 = vmatprep.subr.mxu0 0.0
        %438 = vmatpush1.msra.mxu0 0.0
        %439 = vmatprep.subr.mxu0 0.0
        %440 = vmatpush1.msra.mxu0 0.0
        %441 = vmatprep.subr.mxu0 0.0
        %442 = vmatpush1.msra.mxu0 0.0
        %443 = vmatprep.mubr.f32.mxu0 0.0
        %444 = vmatmul.mubr.f32.gmra.mrb[0].mxu0 %v377
        %v445 = vpop.f32.mrb[0].mxu0
        %v446 = vadd.f32 0.0, %v445
        %v447 = vpop.f32.mrb[0].mxu0
        %448 = vdwg.mxu0
        %v450 = vcombine.high %v446, %v446
        %v452 = vunpack.c.l.s4 1966171168
        %v453 = vunpack.c.0.s8 %v452
        %v454 = vlaneseq
        %v455 = vshrl.u32 %v454, 7
        %v456 = vsub.s32 %v453, %v455
        %v457 = vrot.slane %v446, %v456
        %v459 = vunpack.c.l.s4 1966171168
        %v460 = vunpack.c.0.s8 %v459
        %v461 = vlaneseq
        %v462 = vshrl.u32 %v461, 7
        %v463 = vsub.s32 %v460, %v462
        %v464 = vrot.slane %v450, %v463
        %v465 = vcombine.high %v457, %v457
        %v466 = vcombine.high %v464, %v464
        %v468 = vunpack.c.l.s4 1966171168
        %v469 = vunpack.c.0.s8 %v468
        %v470 = vlaneseq
        %v471 = vshrl.u32 %v470, 7
        %v472 = vsub.s32 %v469, %v471
        %v473 = vrot.slane %v457, %v472
        %v475 = vunpack.c.l.s4 1966171168
        %v476 = vunpack.c.0.s8 %v475
        %v477 = vlaneseq
        %v478 = vshrl.u32 %v477, 7
        %v479 = vsub.s32 %v476, %v478
        %v480 = vrot.slane %v464, %v479
        %v482 = vunpack.c.l.s4 1966171168
        %v483 = vunpack.c.0.s8 %v482
        %v484 = vlaneseq
        %v485 = vshrl.u32 %v484, 7
        %v486 = vsub.s32 %v483, %v485
        %v487 = vrot.slane %v465, %v486
        %v489 = vunpack.c.l.s4 1966171168
        %v490 = vunpack.c.0.s8 %v489
        %v491 = vlaneseq
        %v492 = vshrl.u32 %v491, 7
        %v493 = vsub.s32 %v490, %v492
        %v494 = vrot.slane %v466, %v493
        %v495 = vcombine.high %v473, %v473
        %v496 = vcombine.high %v480, %v480
        %v497 = vcombine.high %v487, %v487
        %v498 = vcombine.high %v494, %v494
        %v499 = vsel %vm375, %v473, 0
        %v502 = vsel %vm375, %v363, 0
        %504 = vmatprep.subr.mxu0 0.0
        %505 = vmatpush1.xpose.msra.mxu0 %v502
        %506 = vmatprep.subr.mxu0 0.0
        %507 = vmatpush1.xpose.msra.mxu0 0.0
        %508 = vmatprep.subr.mxu0 0.0
        %509 = vmatpush1.xpose.msra.mxu0 0.0
        %510 = vmatprep.subr.mxu0 0.0
        %511 = vmatpush1.xpose.msra.mxu0 0.0
        %512 = vmatprep.subr.mxu0 0.0
        %513 = vmatpush1.xpose.msra.mxu0 0.0
        %514 = vmatprep.subr.mxu0 0.0
        %515 = vmatpush1.xpose.msra.mxu0 0.0
        %516 = vmatprep.subr.mxu0 0.0
        %517 = vmatpush1.xpose.msra.mxu0 0.0
        %518 = vmatprep.subr.mxu0 0.0
        %519 = vmatpush1.xpose.msra.mxu0 0.0
        %520 = vmatprep.subr.mxu0 0.0
        %521 = vmatpush1.xpose.msra.mxu0 0.0
        %522 = vmatprep.subr.mxu0 0.0
        %523 = vmatpush1.xpose.msra.mxu0 0.0
        %524 = vmatprep.subr.mxu0 0.0
        %525 = vmatpush1.xpose.msra.mxu0 0.0
        %526 = vmatprep.subr.mxu0 0.0
        %527 = vmatpush1.xpose.msra.mxu0 0.0
        %528 = vmatprep.subr.mxu0 0.0
        %529 = vmatpush1.xpose.msra.mxu0 0.0
        %530 = vmatprep.subr.mxu0 0.0
        %531 = vmatpush1.xpose.msra.mxu0 0.0
        %532 = vmatprep.subr.mxu0 0.0
        %533 = vmatpush1.xpose.msra.mxu0 0.0
        %534 = vmatprep.subr.mxu0 0.0
        %535 = vmatpush1.xpose.msra.mxu0 0.0
        %536 = vmatprep.subr.mxu0 0.0
        %537 = vmatpush1.xpose.msra.mxu0 0.0
        %538 = vmatprep.subr.mxu0 0.0
        %539 = vmatpush1.xpose.msra.mxu0 0.0
        %540 = vmatprep.subr.mxu0 0.0
        %541 = vmatpush1.xpose.msra.mxu0 0.0
        %542 = vmatprep.subr.mxu0 0.0
        %543 = vmatpush1.xpose.msra.mxu0 0.0
        %544 = vmatprep.subr.mxu0 0.0
        %545 = vmatpush1.xpose.msra.mxu0 0.0
        %546 = vmatprep.subr.mxu0 0.0
        %547 = vmatpush1.xpose.msra.mxu0 0.0
        %548 = vmatprep.subr.mxu0 0.0
        %549 = vmatpush1.xpose.msra.mxu0 0.0
        %550 = vmatprep.subr.mxu0 0.0
        %551 = vmatpush1.xpose.msra.mxu0 0.0
        %552 = vmatprep.subr.mxu0 0.0
        %553 = vmatpush1.xpose.msra.mxu0 0.0
        %554 = vmatprep.subr.mxu0 0.0
        %555 = vmatpush1.xpose.msra.mxu0 0.0
        %556 = vmatprep.subr.mxu0 0.0
        %557 = vmatpush1.xpose.msra.mxu0 0.0
        %558 = vmatprep.subr.mxu0 0.0
        %559 = vmatpush1.xpose.msra.mxu0 0.0
        %560 = vmatprep.subr.mxu0 0.0
        %561 = vmatpush1.xpose.msra.mxu0 0.0
        %562 = vmatprep.subr.mxu0 0.0
        %563 = vmatpush1.xpose.msra.mxu0 0.0
        %564 = vmatprep.subr.mxu0 0.0
        %565 = vmatpush1.xpose.msra.mxu0 0.0
        %566 = vmatprep.subr.mxu0 0.0
        %567 = vmatpush1.xpose.msra.mxu0 0.0
        %568 = vmatprep.mubr.f32.mxu0 0.0
        %569 = vmatmul.mubr.f32.gmra.mrb[0].mxu0 %v499
        %v570 = vpop.f32.mrb[0].mxu0
        %v571 = vadd.f32 0.0, %v570
        %v572 = vpop.f32.mrb[0].mxu0
        %573 = vdwg.mxu0
        %v574 = vsel %vm375, %v487, 0
        %v577 = vsel %vm375, %v364, 0
        %579 = vmatprep.subr.mxu0 0.0
        %580 = vmatpush1.xpose.msra.mxu0 %v577
        %581 = vmatprep.subr.mxu0 0.0
        %582 = vmatpush1.xpose.msra.mxu0 0.0
        %583 = vmatprep.subr.mxu0 0.0
        %584 = vmatpush1.xpose.msra.mxu0 0.0
        %585 = vmatprep.subr.mxu0 0.0
        %586 = vmatpush1.xpose.msra.mxu0 0.0
        %587 = vmatprep.subr.mxu0 0.0
        %588 = vmatpush1.xpose.msra.mxu0 0.0
        %589 = vmatprep.subr.mxu0 0.0
        %590 = vmatpush1.xpose.msra.mxu0 0.0
        %591 = vmatprep.subr.mxu0 0.0
        %592 = vmatpush1.xpose.msra.mxu0 0.0
        %593 = vmatprep.subr.mxu0 0.0
        %594 = vmatpush1.xpose.msra.mxu0 0.0
        %595 = vmatprep.subr.mxu0 0.0
        %596 = vmatpush1.xpose.msra.mxu0 0.0
        %597 = vmatprep.subr.mxu0 0.0
        %598 = vmatpush1.xpose.msra.mxu0 0.0
        %599 = vmatprep.subr.mxu0 0.0
        %600 = vmatpush1.xpose.msra.mxu0 0.0
        %601 = vmatprep.subr.mxu0 0.0
        %602 = vmatpush1.xpose.msra.mxu0 0.0
        %603 = vmatprep.subr.mxu0 0.0
        %604 = vmatpush1.xpose.msra.mxu0 0.0
        %605 = vmatprep.subr.mxu0 0.0
        %606 = vmatpush1.xpose.msra.mxu0 0.0
        %607 = vmatprep.subr.mxu0 0.0
        %608 = vmatpush1.xpose.msra.mxu0 0.0
        %609 = vmatprep.subr.mxu0 0.0
        %610 = vmatpush1.xpose.msra.mxu0 0.0
        %611 = vmatprep.subr.mxu0 0.0
        %612 = vmatpush1.xpose.msra.mxu0 0.0
        %613 = vmatprep.subr.mxu0 0.0
        %614 = vmatpush1.xpose.msra.mxu0 0.0
        %615 = vmatprep.subr.mxu0 0.0
        %616 = vmatpush1.xpose.msra.mxu0 0.0
        %617 = vmatprep.subr.mxu0 0.0
        %618 = vmatpush1.xpose.msra.mxu0 0.0
        %619 = vmatprep.subr.mxu0 0.0
        %620 = vmatpush1.xpose.msra.mxu0 0.0
        %621 = vmatprep.subr.mxu0 0.0
        %622 = vmatpush1.xpose.msra.mxu0 0.0
        %623 = vmatprep.subr.mxu0 0.0
        %624 = vmatpush1.xpose.msra.mxu0 0.0
        %625 = vmatprep.subr.mxu0 0.0
        %626 = vmatpush1.xpose.msra.mxu0 0.0
        %627 = vmatprep.subr.mxu0 0.0
        %628 = vmatpush1.xpose.msra.mxu0 0.0
        %629 = vmatprep.subr.mxu0 0.0
        %630 = vmatpush1.xpose.msra.mxu0 0.0
        %631 = vmatprep.subr.mxu0 0.0
        %632 = vmatpush1.xpose.msra.mxu0 0.0
        %633 = vmatprep.subr.mxu0 0.0
        %634 = vmatpush1.xpose.msra.mxu0 0.0
        %635 = vmatprep.subr.mxu0 0.0
        %636 = vmatpush1.xpose.msra.mxu0 0.0
        %637 = vmatprep.subr.mxu0 0.0
        %638 = vmatpush1.xpose.msra.mxu0 0.0
        %639 = vmatprep.subr.mxu0 0.0
        %640 = vmatpush1.xpose.msra.mxu0 0.0
        %641 = vmatprep.subr.mxu0 0.0
        %642 = vmatpush1.xpose.msra.mxu0 0.0
        %643 = vmatprep.mubr.f32.mxu0 0.0
        %644 = vmatmul.mubr.f32.gmra.mrb[0].mxu0 %v574
        %v645 = vpop.f32.mrb[0].mxu0
        %v646 = vadd.f32 0.0, %v645
        %v647 = vpop.f32.mrb[0].mxu0
        %648 = vdwg.mxu0
        %v649 = vsel %vm375, %v495, 0
        %v652 = vsel %vm375, %v365, 0
        %654 = vmatprep.subr.mxu0 0.0
        %655 = vmatpush1.xpose.msra.mxu0 %v652
        %656 = vmatprep.subr.mxu0 0.0
        %657 = vmatpush1.xpose.msra.mxu0 0.0
        %658 = vmatprep.subr.mxu0 0.0
        %659 = vmatpush1.xpose.msra.mxu0 0.0
        %660 = vmatprep.subr.mxu0 0.0
        %661 = vmatpush1.xpose.msra.mxu0 0.0
        %662 = vmatprep.subr.mxu0 0.0
        %663 = vmatpush1.xpose.msra.mxu0 0.0
        %664 = vmatprep.subr.mxu0 0.0
        %665 = vmatpush1.xpose.msra.mxu0 0.0
        %666 = vmatprep.subr.mxu0 0.0
        %667 = vmatpush1.xpose.msra.mxu0 0.0
        %668 = vmatprep.subr.mxu0 0.0
        %669 = vmatpush1.xpose.msra.mxu0 0.0
        %670 = vmatprep.subr.mxu0 0.0
        %671 = vmatpush1.xpose.msra.mxu0 0.0
        %672 = vmatprep.subr.mxu0 0.0
        %673 = vmatpush1.xpose.msra.mxu0 0.0
        %674 = vmatprep.subr.mxu0 0.0
        %675 = vmatpush1.xpose.msra.mxu0 0.0
        %676 = vmatprep.subr.mxu0 0.0
        %677 = vmatpush1.xpose.msra.mxu0 0.0
        %678 = vmatprep.subr.mxu0 0.0
        %679 = vmatpush1.xpose.msra.mxu0 0.0
        %680 = vmatprep.subr.mxu0 0.0
        %681 = vmatpush1.xpose.msra.mxu0 0.0
        %682 = vmatprep.subr.mxu0 0.0
        %683 = vmatpush1.xpose.msra.mxu0 0.0
        %684 = vmatprep.subr.mxu0 0.0
        %685 = vmatpush1.xpose.msra.mxu0 0.0
        %686 = vmatprep.subr.mxu0 0.0
        %687 = vmatpush1.xpose.msra.mxu0 0.0
        %688 = vmatprep.subr.mxu0 0.0
        %689 = vmatpush1.xpose.msra.mxu0 0.0
        %690 = vmatprep.subr.mxu0 0.0
        %691 = vmatpush1.xpose.msra.mxu0 0.0
        %692 = vmatprep.subr.mxu0 0.0
        %693 = vmatpush1.xpose.msra.mxu0 0.0
        %694 = vmatprep.subr.mxu0 0.0
        %695 = vmatpush1.xpose.msra.mxu0 0.0
        %696 = vmatprep.subr.mxu0 0.0
        %697 = vmatpush1.xpose.msra.mxu0 0.0
        %698 = vmatprep.subr.mxu0 0.0
        %699 = vmatpush1.xpose.msra.mxu0 0.0
        %700 = vmatprep.subr.mxu0 0.0
        %701 = vmatpush1.xpose.msra.mxu0 0.0
        %702 = vmatprep.subr.mxu0 0.0
        %703 = vmatpush1.xpose.msra.mxu0 0.0
        %704 = vmatprep.subr.mxu0 0.0
        %705 = vmatpush1.xpose.msra.mxu0 0.0
        %706 = vmatprep.subr.mxu0 0.0
        %707 = vmatpush1.xpose.msra.mxu0 0.0
        %708 = vmatprep.subr.mxu0 0.0
        %709 = vmatpush1.xpose.msra.mxu0 0.0
        %710 = vmatprep.subr.mxu0 0.0
        %711 = vmatpush1.xpose.msra.mxu0 0.0
        %712 = vmatprep.subr.mxu0 0.0
        %713 = vmatpush1.xpose.msra.mxu0 0.0
        %714 = vmatprep.subr.mxu0 0.0
        %715 = vmatpush1.xpose.msra.mxu0 0.0
        %716 = vmatprep.subr.mxu0 0.0
        %717 = vmatpush1.xpose.msra.mxu0 0.0
        %718 = vmatprep.mubr.f32.mxu0 0.0
        %719 = vmatmul.mubr.f32.gmra.mrb[0].mxu0 %v649
        %v720 = vpop.f32.mrb[0].mxu0
        %v721 = vadd.f32 0.0, %v720
        %v722 = vpop.f32.mrb[0].mxu0
        %723 = vdwg.mxu0
        %v724 = vsel %vm375, %v497, 0
        %v727 = vsel %vm375, %v366, 0
        %729 = vmatprep.subr.mxu0 0.0
        %730 = vmatpush1.xpose.msra.mxu0 %v727
        %731 = vmatprep.subr.mxu0 0.0
        %732 = vmatpush1.xpose.msra.mxu0 0.0
        %733 = vmatprep.subr.mxu0 0.0
        %734 = vmatpush1.xpose.msra.mxu0 0.0
        %735 = vmatprep.subr.mxu0 0.0
        %736 = vmatpush1.xpose.msra.mxu0 0.0
        %737 = vmatprep.subr.mxu0 0.0
        %738 = vmatpush1.xpose.msra.mxu0 0.0
        %739 = vmatprep.subr.mxu0 0.0
        %740 = vmatpush1.xpose.msra.mxu0 0.0
        %741 = vmatprep.subr.mxu0 0.0
        %742 = vmatpush1.xpose.msra.mxu0 0.0
        %743 = vmatprep.subr.mxu0 0.0
        %744 = vmatpush1.xpose.msra.mxu0 0.0
        %745 = vmatprep.subr.mxu0 0.0
        %746 = vmatpush1.xpose.msra.mxu0 0.0
        %747 = vmatprep.subr.mxu0 0.0
        %748 = vmatpush1.xpose.msra.mxu0 0.0
        %749 = vmatprep.subr.mxu0 0.0
        %750 = vmatpush1.xpose.msra.mxu0 0.0
        %751 = vmatprep.subr.mxu0 0.0
        %752 = vmatpush1.xpose.msra.mxu0 0.0
        %753 = vmatprep.subr.mxu0 0.0
        %754 = vmatpush1.xpose.msra.mxu0 0.0
        %755 = vmatprep.subr.mxu0 0.0
        %756 = vmatpush1.xpose.msra.mxu0 0.0
        %757 = vmatprep.subr.mxu0 0.0
        %758 = vmatpush1.xpose.msra.mxu0 0.0
        %759 = vmatprep.subr.mxu0 0.0
        %760 = vmatpush1.xpose.msra.mxu0 0.0
        %761 = vmatprep.subr.mxu0 0.0
        %762 = vmatpush1.xpose.msra.mxu0 0.0
        %763 = vmatprep.subr.mxu0 0.0
        %764 = vmatpush1.xpose.msra.mxu0 0.0
        %765 = vmatprep.subr.mxu0 0.0
        %766 = vmatpush1.xpose.msra.mxu0 0.0
        %767 = vmatprep.subr.mxu0 0.0
        %768 = vmatpush1.xpose.msra.mxu0 0.0
        %769 = vmatprep.subr.mxu0 0.0
        %770 = vmatpush1.xpose.msra.mxu0 0.0
        %771 = vmatprep.subr.mxu0 0.0
        %772 = vmatpush1.xpose.msra.mxu0 0.0
        %773 = vmatprep.subr.mxu0 0.0
        %774 = vmatpush1.xpose.msra.mxu0 0.0
        %775 = vmatprep.subr.mxu0 0.0
        %776 = vmatpush1.xpose.msra.mxu0 0.0
        %777 = vmatprep.subr.mxu0 0.0
        %778 = vmatpush1.xpose.msra.mxu0 0.0
        %779 = vmatprep.subr.mxu0 0.0
        %780 = vmatpush1.xpose.msra.mxu0 0.0
        %781 = vmatprep.subr.mxu0 0.0
        %782 = vmatpush1.xpose.msra.mxu0 0.0
        %783 = vmatprep.subr.mxu0 0.0
        %784 = vmatpush1.xpose.msra.mxu0 0.0
        %785 = vmatprep.subr.mxu0 0.0
        %786 = vmatpush1.xpose.msra.mxu0 0.0
        %787 = vmatprep.subr.mxu0 0.0
        %788 = vmatpush1.xpose.msra.mxu0 0.0
        %789 = vmatprep.subr.mxu0 0.0
        %790 = vmatpush1.xpose.msra.mxu0 0.0
        %791 = vmatprep.subr.mxu0 0.0
        %792 = vmatpush1.xpose.msra.mxu0 0.0
        %793 = vmatprep.mubr.f32.mxu0 0.0
        %794 = vmatmul.mubr.f32.gmra.mrb[0].mxu0 %v724
        %v795 = vpop.f32.mrb[0].mxu0
        %v796 = vadd.f32 0.0, %v795
        %v797 = vpop.f32.mrb[0].mxu0
        %798 = vdwg.mxu0
        %v799 = vsel %vm375, %v480, 0
        %v802 = vsel %vm375, %v367, 0
        %804 = vmatprep.subr.mxu0 0.0
        %805 = vmatpush1.xpose.msra.mxu0 %v802
        %806 = vmatprep.subr.mxu0 0.0
        %807 = vmatpush1.xpose.msra.mxu0 0.0
        %808 = vmatprep.subr.mxu0 0.0
        %809 = vmatpush1.xpose.msra.mxu0 0.0
        %810 = vmatprep.subr.mxu0 0.0
        %811 = vmatpush1.xpose.msra.mxu0 0.0
        %812 = vmatprep.subr.mxu0 0.0
        %813 = vmatpush1.xpose.msra.mxu0 0.0
        %814 = vmatprep.subr.mxu0 0.0
        %815 = vmatpush1.xpose.msra.mxu0 0.0
        %816 = vmatprep.subr.mxu0 0.0
        %817 = vmatpush1.xpose.msra.mxu0 0.0
        %818 = vmatprep.subr.mxu0 0.0
        %819 = vmatpush1.xpose.msra.mxu0 0.0
        %820 = vmatprep.subr.mxu0 0.0
        %821 = vmatpush1.xpose.msra.mxu0 0.0
        %822 = vmatprep.subr.mxu0 0.0
        %823 = vmatpush1.xpose.msra.mxu0 0.0
        %824 = vmatprep.subr.mxu0 0.0
        %825 = vmatpush1.xpose.msra.mxu0 0.0
        %826 = vmatprep.subr.mxu0 0.0
        %827 = vmatpush1.xpose.msra.mxu0 0.0
        %828 = vmatprep.subr.mxu0 0.0
        %829 = vmatpush1.xpose.msra.mxu0 0.0
        %830 = vmatprep.subr.mxu0 0.0
        %831 = vmatpush1.xpose.msra.mxu0 0.0
        %832 = vmatprep.subr.mxu0 0.0
        %833 = vmatpush1.xpose.msra.mxu0 0.0
        %834 = vmatprep.subr.mxu0 0.0
        %835 = vmatpush1.xpose.msra.mxu0 0.0
        %836 = vmatprep.subr.mxu0 0.0
        %837 = vmatpush1.xpose.msra.mxu0 0.0
        %838 = vmatprep.subr.mxu0 0.0
        %839 = vmatpush1.xpose.msra.mxu0 0.0
        %840 = vmatprep.subr.mxu0 0.0
        %841 = vmatpush1.xpose.msra.mxu0 0.0
        %842 = vmatprep.subr.mxu0 0.0
        %843 = vmatpush1.xpose.msra.mxu0 0.0
        %844 = vmatprep.subr.mxu0 0.0
        %845 = vmatpush1.xpose.msra.mxu0 0.0
        %846 = vmatprep.subr.mxu0 0.0
        %847 = vmatpush1.xpose.msra.mxu0 0.0
        %848 = vmatprep.subr.mxu0 0.0
        %849 = vmatpush1.xpose.msra.mxu0 0.0
        %850 = vmatprep.subr.mxu0 0.0
        %851 = vmatpush1.xpose.msra.mxu0 0.0
        %852 = vmatprep.subr.mxu0 0.0
        %853 = vmatpush1.xpose.msra.mxu0 0.0
        %854 = vmatprep.subr.mxu0 0.0
        %855 = vmatpush1.xpose.msra.mxu0 0.0
        %856 = vmatprep.subr.mxu0 0.0
        %857 = vmatpush1.xpose.msra.mxu0 0.0
        %858 = vmatprep.subr.mxu0 0.0
        %859 = vmatpush1.xpose.msra.mxu0 0.0
        %860 = vmatprep.subr.mxu0 0.0
        %861 = vmatpush1.xpose.msra.mxu0 0.0
        %862 = vmatprep.subr.mxu0 0.0
        %863 = vmatpush1.xpose.msra.mxu0 0.0
        %864 = vmatprep.subr.mxu0 0.0
        %865 = vmatpush1.xpose.msra.mxu0 0.0
        %866 = vmatprep.subr.mxu0 0.0
        %867 = vmatpush1.xpose.msra.mxu0 0.0
        %868 = vmatprep.mubr.f32.mxu0 0.0
        %869 = vmatmul.mubr.f32.gmra.mrb[0].mxu0 %v799
        %v870 = vpop.f32.mrb[0].mxu0
        %v871 = vadd.f32 0.0, %v870
        %v872 = vpop.f32.mrb[0].mxu0
        %873 = vdwg.mxu0
        %v874 = vsel %vm375, %v494, 0
        %v877 = vsel %vm375, %v368, 0
        %879 = vmatprep.subr.mxu0 0.0
        %880 = vmatpush1.xpose.msra.mxu0 %v877
        %881 = vmatprep.subr.mxu0 0.0
        %882 = vmatpush1.xpose.msra.mxu0 0.0
        %883 = vmatprep.subr.mxu0 0.0
        %884 = vmatpush1.xpose.msra.mxu0 0.0
        %885 = vmatprep.subr.mxu0 0.0
        %886 = vmatpush1.xpose.msra.mxu0 0.0
        %887 = vmatprep.subr.mxu0 0.0
        %888 = vmatpush1.xpose.msra.mxu0 0.0
        %889 = vmatprep.subr.mxu0 0.0
        %890 = vmatpush1.xpose.msra.mxu0 0.0
        %891 = vmatprep.subr.mxu0 0.0
        %892 = vmatpush1.xpose.msra.mxu0 0.0
        %893 = vmatprep.subr.mxu0 0.0
        %894 = vmatpush1.xpose.msra.mxu0 0.0
        %895 = vmatprep.subr.mxu0 0.0
        %896 = vmatpush1.xpose.msra.mxu0 0.0
        %897 = vmatprep.subr.mxu0 0.0
        %898 = vmatpush1.xpose.msra.mxu0 0.0
        %899 = vmatprep.subr.mxu0 0.0
        %900 = vmatpush1.xpose.msra.mxu0 0.0
        %901 = vmatprep.subr.mxu0 0.0
        %902 = vmatpush1.xpose.msra.mxu0 0.0
        %903 = vmatprep.subr.mxu0 0.0
        %904 = vmatpush1.xpose.msra.mxu0 0.0
        %905 = vmatprep.subr.mxu0 0.0
        %906 = vmatpush1.xpose.msra.mxu0 0.0
        %907 = vmatprep.subr.mxu0 0.0
        %908 = vmatpush1.xpose.msra.mxu0 0.0
        %909 = vmatprep.subr.mxu0 0.0
        %910 = vmatpush1.xpose.msra.mxu0 0.0
        %911 = vmatprep.subr.mxu0 0.0
        %912 = vmatpush1.xpose.msra.mxu0 0.0
        %913 = vmatprep.subr.mxu0 0.0
        %914 = vmatpush1.xpose.msra.mxu0 0.0
        %915 = vmatprep.subr.mxu0 0.0
        %916 = vmatpush1.xpose.msra.mxu0 0.0
        %917 = vmatprep.subr.mxu0 0.0
        %918 = vmatpush1.xpose.msra.mxu0 0.0
        %919 = vmatprep.subr.mxu0 0.0
        %920 = vmatpush1.xpose.msra.mxu0 0.0
        %921 = vmatprep.subr.mxu0 0.0
        %922 = vmatpush1.xpose.msra.mxu0 0.0
        %923 = vmatprep.subr.mxu0 0.0
        %924 = vmatpush1.xpose.msra.mxu0 0.0
        %925 = vmatprep.subr.mxu0 0.0
        %926 = vmatpush1.xpose.msra.mxu0 0.0
        %927 = vmatprep.subr.mxu0 0.0
        %928 = vmatpush1.xpose.msra.mxu0 0.0
        %929 = vmatprep.subr.mxu0 0.0
        %930 = vmatpush1.xpose.msra.mxu0 0.0
        %931 = vmatprep.subr.mxu0 0.0
        %932 = vmatpush1.xpose.msra.mxu0 0.0
        %933 = vmatprep.subr.mxu0 0.0
        %934 = vmatpush1.xpose.msra.mxu0 0.0
        %935 = vmatprep.subr.mxu0 0.0
        %936 = vmatpush1.xpose.msra.mxu0 0.0
        %937 = vmatprep.subr.mxu0 0.0
        %938 = vmatpush1.xpose.msra.mxu0 0.0
        %939 = vmatprep.subr.mxu0 0.0
        %940 = vmatpush1.xpose.msra.mxu0 0.0
        %941 = vmatprep.subr.mxu0 0.0
        %942 = vmatpush1.xpose.msra.mxu0 0.0
        %943 = vmatprep.mubr.f32.mxu0 0.0
        %944 = vmatmul.mubr.f32.gmra.mrb[0].mxu0 %v874
        %v945 = vpop.f32.mrb[0].mxu0
        %v946 = vadd.f32 0.0, %v945
        %v947 = vpop.f32.mrb[0].mxu0
        %948 = vdwg.mxu0
        %v949 = vsel %vm375, %v496, 0
        %v952 = vsel %vm375, %v369, 0
        %954 = vmatprep.subr.mxu0 0.0
        %955 = vmatpush1.xpose.msra.mxu0 %v952
        %956 = vmatprep.subr.mxu0 0.0
        %957 = vmatpush1.xpose.msra.mxu0 0.0
        %958 = vmatprep.subr.mxu0 0.0
        %959 = vmatpush1.xpose.msra.mxu0 0.0
        %960 = vmatprep.subr.mxu0 0.0
        %961 = vmatpush1.xpose.msra.mxu0 0.0
        %962 = vmatprep.subr.mxu0 0.0
        %963 = vmatpush1.xpose.msra.mxu0 0.0
        %964 = vmatprep.subr.mxu0 0.0
        %965 = vmatpush1.xpose.msra.mxu0 0.0
        %966 = vmatprep.subr.mxu0 0.0
        %967 = vmatpush1.xpose.msra.mxu0 0.0
        %968 = vmatprep.subr.mxu0 0.0
        %969 = vmatpush1.xpose.msra.mxu0 0.0
        %970 = vmatprep.subr.mxu0 0.0
        %971 = vmatpush1.xpose.msra.mxu0 0.0
        %972 = vmatprep.subr.mxu0 0.0
        %973 = vmatpush1.xpose.msra.mxu0 0.0
        %974 = vmatprep.subr.mxu0 0.0
        %975 = vmatpush1.xpose.msra.mxu0 0.0
        %976 = vmatprep.subr.mxu0 0.0
        %977 = vmatpush1.xpose.msra.mxu0 0.0
        %978 = vmatprep.subr.mxu0 0.0
        %979 = vmatpush1.xpose.msra.mxu0 0.0
        %980 = vmatprep.subr.mxu0 0.0
        %981 = vmatpush1.xpose.msra.mxu0 0.0
        %982 = vmatprep.subr.mxu0 0.0
        %983 = vmatpush1.xpose.msra.mxu0 0.0
        %984 = vmatprep.subr.mxu0 0.0
        %985 = vmatpush1.xpose.msra.mxu0 0.0
        %986 = vmatprep.subr.mxu0 0.0
        %987 = vmatpush1.xpose.msra.mxu0 0.0
        %988 = vmatprep.subr.mxu0 0.0
        %989 = vmatpush1.xpose.msra.mxu0 0.0
        %990 = vmatprep.subr.mxu0 0.0
        %991 = vmatpush1.xpose.msra.mxu0 0.0
        %992 = vmatprep.subr.mxu0 0.0
        %993 = vmatpush1.xpose.msra.mxu0 0.0
        %994 = vmatprep.subr.mxu0 0.0
        %995 = vmatpush1.xpose.msra.mxu0 0.0
        %996 = vmatprep.subr.mxu0 0.0
        %997 = vmatpush1.xpose.msra.mxu0 0.0
        %998 = vmatprep.subr.mxu0 0.0
        %999 = vmatpush1.xpose.msra.mxu0 0.0
        %1000 = vmatprep.subr.mxu0 0.0
        %1001 = vmatpush1.xpose.msra.mxu0 0.0
        %1002 = vmatprep.subr.mxu0 0.0
        %1003 = vmatpush1.xpose.msra.mxu0 0.0
        %1004 = vmatprep.subr.mxu0 0.0
        %1005 = vmatpush1.xpose.msra.mxu0 0.0
        %1006 = vmatprep.subr.mxu0 0.0
        %1007 = vmatpush1.xpose.msra.mxu0 0.0
        %1008 = vmatprep.subr.mxu0 0.0
        %1009 = vmatpush1.xpose.msra.mxu0 0.0
        %1010 = vmatprep.subr.mxu0 0.0
        %1011 = vmatpush1.xpose.msra.mxu0 0.0
        %1012 = vmatprep.subr.mxu0 0.0
        %1013 = vmatpush1.xpose.msra.mxu0 0.0
        %1014 = vmatprep.subr.mxu0 0.0
        %1015 = vmatpush1.xpose.msra.mxu0 0.0
        %1016 = vmatprep.subr.mxu0 0.0
        %1017 = vmatpush1.xpose.msra.mxu0 0.0
        %1018 = vmatprep.mubr.f32.mxu0 0.0
        %1019 = vmatmul.mubr.f32.gmra.mrb[0].mxu0 %v949
        %v1020 = vpop.f32.mrb[0].mxu0
        %v1021 = vadd.f32 0.0, %v1020
        %v1022 = vpop.f32.mrb[0].mxu0
        %1023 = vdwg.mxu0
        %v1024 = vsel %vm375, %v498, 0
        %v1027 = vsel %vm375, %v370, 0
        %1029 = vmatprep.subr.mxu0 0.0
        %1030 = vmatpush1.xpose.msra.mxu0 %v1027
        %1031 = vmatprep.subr.mxu0 0.0
        %1032 = vmatpush1.xpose.msra.mxu0 0.0
        %1033 = vmatprep.subr.mxu0 0.0
        %1034 = vmatpush1.xpose.msra.mxu0 0.0
        %1035 = vmatprep.subr.mxu0 0.0
        %1036 = vmatpush1.xpose.msra.mxu0 0.0
        %1037 = vmatprep.subr.mxu0 0.0
        %1038 = vmatpush1.xpose.msra.mxu0 0.0
        %1039 = vmatprep.subr.mxu0 0.0
        %1040 = vmatpush1.xpose.msra.mxu0 0.0
        %1041 = vmatprep.subr.mxu0 0.0
        %1042 = vmatpush1.xpose.msra.mxu0 0.0
        %1043 = vmatprep.subr.mxu0 0.0
        %1044 = vmatpush1.xpose.msra.mxu0 0.0
        %1045 = vmatprep.subr.mxu0 0.0
        %1046 = vmatpush1.xpose.msra.mxu0 0.0
        %1047 = vmatprep.subr.mxu0 0.0
        %1048 = vmatpush1.xpose.msra.mxu0 0.0
        %1049 = vmatprep.subr.mxu0 0.0
        %1050 = vmatpush1.xpose.msra.mxu0 0.0
        %1051 = vmatprep.subr.mxu0 0.0
        %1052 = vmatpush1.xpose.msra.mxu0 0.0
        %1053 = vmatprep.subr.mxu0 0.0
        %1054 = vmatpush1.xpose.msra.mxu0 0.0
        %1055 = vmatprep.subr.mxu0 0.0
        %1056 = vmatpush1.xpose.msra.mxu0 0.0
        %1057 = vmatprep.subr.mxu0 0.0
        %1058 = vmatpush1.xpose.msra.mxu0 0.0
        %1059 = vmatprep.subr.mxu0 0.0
        %1060 = vmatpush1.xpose.msra.mxu0 0.0
        %1061 = vmatprep.subr.mxu0 0.0
        %1062 = vmatpush1.xpose.msra.mxu0 0.0
        %1063 = vmatprep.subr.mxu0 0.0
        %1064 = vmatpush1.xpose.msra.mxu0 0.0
        %1065 = vmatprep.subr.mxu0 0.0
        %1066 = vmatpush1.xpose.msra.mxu0 0.0
        %1067 = vmatprep.subr.mxu0 0.0
        %1068 = vmatpush1.xpose.msra.mxu0 0.0
        %1069 = vmatprep.subr.mxu0 0.0
        %1070 = vmatpush1.xpose.msra.mxu0 0.0
        %1071 = vmatprep.subr.mxu0 0.0
        %1072 = vmatpush1.xpose.msra.mxu0 0.0
        %1073 = vmatprep.subr.mxu0 0.0
        %1074 = vmatpush1.xpose.msra.mxu0 0.0
        %1075 = vmatprep.subr.mxu0 0.0
        %1076 = vmatpush1.xpose.msra.mxu0 0.0
        %1077 = vmatprep.subr.mxu0 0.0
        %1078 = vmatpush1.xpose.msra.mxu0 0.0
        %1079 = vmatprep.subr.mxu0 0.0
        %1080 = vmatpush1.xpose.msra.mxu0 0.0
        %1081 = vmatprep.subr.mxu0 0.0
        %1082 = vmatpush1.xpose.msra.mxu0 0.0
        %1083 = vmatprep.subr.mxu0 0.0
        %1084 = vmatpush1.xpose.msra.mxu0 0.0
        %1085 = vmatprep.subr.mxu0 0.0
        %1086 = vmatpush1.xpose.msra.mxu0 0.0
        %1087 = vmatprep.subr.mxu0 0.0
        %1088 = vmatpush1.xpose.msra.mxu0 0.0
        %1089 = vmatprep.subr.mxu0 0.0
        %1090 = vmatpush1.xpose.msra.mxu0 0.0
        %1091 = vmatprep.subr.mxu0 0.0
        %1092 = vmatpush1.xpose.msra.mxu0 0.0
        %1093 = vmatprep.mubr.f32.mxu0 0.0
        %1094 = vmatmul.mubr.f32.gmra.mrb[0].mxu0 %v1024
        %v1095 = vpop.f32.mrb[0].mxu0
        %v1096 = vadd.f32 0.0, %v1095
        %v1097 = vpop.f32.mrb[0].mxu0
        %1098 = vdwg.mxu0
        %v1107 = vrot.slane %v646, 7
        %vm1108 = vcmask 1041409
        %v1109 = vsel %vm1108, %v1107, %v571
        %v1110 = vrot.slane %v721, 6
        %vm1111 = vcmask 1042434
        %v1112 = vsel %vm1111, %v1110, %v1109
        %v1113 = vrot.slane %v796, 5
        %vm1114 = vcmask 1043459
        %v1115 = vsel %vm1114, %v1113, %v1112
        %v1116 = vrot.slane %v871, 4
        %vm1117 = vcmask 1044484
        %v1118 = vsel %vm1117, %v1116, %v1115
        %v1119 = vrot.slane %v946, 3
        %vm1120 = vcmask 1045509
        %v1121 = vsel %vm1120, %v1119, %v1118
        %v1122 = vrot.slane %v1021, 2
        %vm1123 = vcmask 1046534
        %v1124 = vsel %vm1123, %v1122, %v1121
        %v1125 = vrot.slane %v1096, 1
        %vm1126 = vcmask 1047559
        %v1127 = vsel %vm1126, %v1125, %v1124
        %vm1129 = vcmask 64512
        %v1130 = vsel %vm1129, %v1127, -inf
        %1131 = vmax.xlane.f32.xlu0 %v1130
        %v1132 = vpop.xlane.xlu0 %1131
        %v1134 = vrot.slane %v1132, 1
        %v1135 = vrot.slane %v1132, 2
        %v1136 = vrot.slane %v1132, 3
        %v1137 = vrot.slane %v1132, 4
        %v1138 = vrot.slane %v1132, 5
        %v1139 = vrot.slane %v1132, 6
        %v1140 = vrot.slane %v1132, 7
        %v1149 = vsub.f32 %v571, %v1132
        %v1150 = vsub.f32 %v646, %v1134
        %v1151 = vsub.f32 %v721, %v1135
        %v1152 = vsub.f32 %v796, %v1136
        %v1153 = vsub.f32 %v871, %v1137
        %v1154 = vsub.f32 %v946, %v1138
        %v1155 = vsub.f32 %v1021, %v1139
        %v1156 = vsub.f32 %v1096, %v1140
        %v1157 = vmul.f32 %v1149, 1.442695
        %v1158 = vpow.pop %v1157
        %v1159 = vmul.f32 %v1150, 1.442695
        %v1160 = vpow.pop %v1159
        %v1161 = vmul.f32 %v1151, 1.442695
        %v1162 = vpow.pop %v1161
        %v1163 = vmul.f32 %v1152, 1.442695
        %v1164 = vpow.pop %v1163
        %v1165 = vmul.f32 %v1153, 1.442695
        %v1166 = vpow.pop %v1165
        %v1167 = vmul.f32 %v1154, 1.442695
        %v1168 = vpow.pop %v1167
        %v1169 = vmul.f32 %v1155, 1.442695
        %v1170 = vpow.pop %v1169
        %v1171 = vmul.f32 %v1156, 1.442695
        %v1172 = vpow.pop %v1171
        %v1181 = vrot.slane %v1160, 7
        %v1182 = vsel %vm1108, %v1181, %v1158
        %v1183 = vrot.slane %v1162, 6
        %v1184 = vsel %vm1111, %v1183, %v1182
        %v1185 = vrot.slane %v1164, 5
        %v1186 = vsel %vm1114, %v1185, %v1184
        %v1187 = vrot.slane %v1166, 4
        %v1188 = vsel %vm1117, %v1187, %v1186
        %v1189 = vrot.slane %v1168, 3
        %v1190 = vsel %vm1120, %v1189, %v1188
        %v1191 = vrot.slane %v1170, 2
        %v1192 = vsel %vm1123, %v1191, %v1190
        %v1193 = vrot.slane %v1172, 1
        %v1194 = vsel %vm1126, %v1193, %v1192
        %v1196 = vsel %vm1129, %v1194, 0.0
        %1197 = vadd.xlane.f32.xlu0 %v1196
        %v1198 = vpop.xlane.xlu0 %1197
        %v1200 = vrot.slane %v1198, 1
        %v1201 = vrot.slane %v1198, 2
        %v1202 = vrot.slane %v1198, 3
        %v1203 = vrot.slane %v1198, 4
        %v1204 = vrot.slane %v1198, 5
        %v1205 = vrot.slane %v1198, 6
        %v1206 = vrot.slane %v1198, 7
        %v1215 = vrcp.pop %v1198
        %v1216 = vmul.f32 %v1158, %v1215
        %v1217 = vrcp.pop %v1200
        %v1218 = vmul.f32 %v1160, %v1217
        %v1219 = vrcp.pop %v1201
        %v1220 = vmul.f32 %v1162, %v1219
        %v1221 = vrcp.pop %v1202
        %v1222 = vmul.f32 %v1164, %v1221
        %v1223 = vrcp.pop %v1203
        %v1224 = vmul.f32 %v1166, %v1223
        %v1225 = vrcp.pop %v1204
        %v1226 = vmul.f32 %v1168, %v1225
        %v1227 = vrcp.pop %v1205
        %v1228 = vmul.f32 %v1170, %v1227
        %v1229 = vrcp.pop %v1206
        %v1230 = vmul.f32 %v1172, %v1229
        %v1232 = vsel %vm1129, %v1216, 0
        %1234 = vmatprep.subr.mxu0 0.0
        %1235 = vmatpush1.msra.mxu0 %v363
        %1236 = vmatprep.subr.mxu0 0.0
        %1237 = vmatpush1.msra.mxu0 0.0
        %1238 = vmatprep.subr.mxu0 0.0
        %1239 = vmatpush1.msra.mxu0 0.0
        %1240 = vmatprep.subr.mxu0 0.0
        %1241 = vmatpush1.msra.mxu0 0.0
        %1242 = vmatprep.subr.mxu0 0.0
        %1243 = vmatpush1.msra.mxu0 0.0
        %1244 = vmatprep.subr.mxu0 0.0
        %1245 = vmatpush1.msra.mxu0 0.0
        %1246 = vmatprep.subr.mxu0 0.0
        %1247 = vmatpush1.msra.mxu0 0.0
        %1248 = vmatprep.subr.mxu0 0.0
        %1249 = vmatpush1.msra.mxu0 0.0
        %1250 = vmatprep.subr.mxu0 0.0
        %1251 = vmatpush1.msra.mxu0 0.0
        %1252 = vmatprep.subr.mxu0 0.0
        %1253 = vmatpush1.msra.mxu0 0.0
        %1254 = vmatprep.subr.mxu0 0.0
        %1255 = vmatpush1.msra.mxu0 0.0
        %1256 = vmatprep.subr.mxu0 0.0
        %1257 = vmatpush1.msra.mxu0 0.0
        %1258 = vmatprep.subr.mxu0 0.0
        %1259 = vmatpush1.msra.mxu0 0.0
        %1260 = vmatprep.subr.mxu0 0.0
        %1261 = vmatpush1.msra.mxu0 0.0
        %1262 = vmatprep.subr.mxu0 0.0
        %1263 = vmatpush1.msra.mxu0 0.0
        %1264 = vmatprep.subr.mxu0 0.0
        %1265 = vmatpush1.msra.mxu0 0.0
        %1266 = vmatprep.subr.mxu0 0.0
        %1267 = vmatpush1.msra.mxu0 0.0
        %1268 = vmatprep.subr.mxu0 0.0
        %1269 = vmatpush1.msra.mxu0 0.0
        %1270 = vmatprep.subr.mxu0 0.0
        %1271 = vmatpush1.msra.mxu0 0.0
        %1272 = vmatprep.subr.mxu0 0.0
        %1273 = vmatpush1.msra.mxu0 0.0
        %1274 = vmatprep.subr.mxu0 0.0
        %1275 = vmatpush1.msra.mxu0 0.0
        %1276 = vmatprep.subr.mxu0 0.0
        %1277 = vmatpush1.msra.mxu0 0.0
        %1278 = vmatprep.subr.mxu0 0.0
        %1279 = vmatpush1.msra.mxu0 0.0
        %1280 = vmatprep.subr.mxu0 0.0
        %1281 = vmatpush1.msra.mxu0 0.0
        %1282 = vmatprep.subr.mxu0 0.0
        %1283 = vmatpush1.msra.mxu0 0.0
        %1284 = vmatprep.subr.mxu0 0.0
        %1285 = vmatpush1.msra.mxu0 0.0
        %1286 = vmatprep.subr.mxu0 0.0
        %1287 = vmatpush1.msra.mxu0 0.0
        %1288 = vmatprep.subr.mxu0 0.0
        %1289 = vmatpush1.msra.mxu0 0.0
        %1290 = vmatprep.subr.mxu0 0.0
        %1291 = vmatpush1.msra.mxu0 0.0
        %1292 = vmatprep.subr.mxu0 0.0
        %1293 = vmatpush1.msra.mxu0 0.0
        %1294 = vmatprep.subr.mxu0 0.0
        %1295 = vmatpush1.msra.mxu0 0.0
        %1296 = vmatprep.subr.mxu0 0.0
        %1297 = vmatpush1.msra.mxu0 0.0
        %1298 = vmatprep.mubr.f32.mxu0 0.0
        %1299 = vmatmul.mubr.f32.gmra.mrb[0].mxu0 %v1232
        %v1300 = vpop.f32.mrb[0].mxu0
        %v1301 = vadd.f32 0.0, %v1300
        %v1302 = vpop.f32.mrb[0].mxu0
        %1303 = vdwg.mxu0
        %v1305 = vsel %vm1129, %v1218, 0
        %1307 = vmatprep.subr.mxu0 0.0
        %1308 = vmatpush1.msra.mxu0 %v364
        %1309 = vmatprep.subr.mxu0 0.0
        %1310 = vmatpush1.msra.mxu0 0.0
        %1311 = vmatprep.subr.mxu0 0.0
        %1312 = vmatpush1.msra.mxu0 0.0
        %1313 = vmatprep.subr.mxu0 0.0
        %1314 = vmatpush1.msra.mxu0 0.0
        %1315 = vmatprep.subr.mxu0 0.0
        %1316 = vmatpush1.msra.mxu0 0.0
        %1317 = vmatprep.subr.mxu0 0.0
        %1318 = vmatpush1.msra.mxu0 0.0
        %1319 = vmatprep.subr.mxu0 0.0
        %1320 = vmatpush1.msra.mxu0 0.0
        %1321 = vmatprep.subr.mxu0 0.0
        %1322 = vmatpush1.msra.mxu0 0.0
        %1323 = vmatprep.subr.mxu0 0.0
        %1324 = vmatpush1.msra.mxu0 0.0
        %1325 = vmatprep.subr.mxu0 0.0
        %1326 = vmatpush1.msra.mxu0 0.0
        %1327 = vmatprep.subr.mxu0 0.0
        %1328 = vmatpush1.msra.mxu0 0.0
        %1329 = vmatprep.subr.mxu0 0.0
        %1330 = vmatpush1.msra.mxu0 0.0
        %1331 = vmatprep.subr.mxu0 0.0
        %1332 = vmatpush1.msra.mxu0 0.0
        %1333 = vmatprep.subr.mxu0 0.0
        %1334 = vmatpush1.msra.mxu0 0.0
        %1335 = vmatprep.subr.mxu0 0.0
        %1336 = vmatpush1.msra.mxu0 0.0
        %1337 = vmatprep.subr.mxu0 0.0
        %1338 = vmatpush1.msra.mxu0 0.0
        %1339 = vmatprep.subr.mxu0 0.0
        %1340 = vmatpush1.msra.mxu0 0.0
        %1341 = vmatprep.subr.mxu0 0.0
        %1342 = vmatpush1.msra.mxu0 0.0
        %1343 = vmatprep.subr.mxu0 0.0
        %1344 = vmatpush1.msra.mxu0 0.0
        %1345 = vmatprep.subr.mxu0 0.0
        %1346 = vmatpush1.msra.mxu0 0.0
        %1347 = vmatprep.subr.mxu0 0.0
        %1348 = vmatpush1.msra.mxu0 0.0
        %1349 = vmatprep.subr.mxu0 0.0
        %1350 = vmatpush1.msra.mxu0 0.0
        %1351 = vmatprep.subr.mxu0 0.0
        %1352 = vmatpush1.msra.mxu0 0.0
        %1353 = vmatprep.subr.mxu0 0.0
        %1354 = vmatpush1.msra.mxu0 0.0
        %1355 = vmatprep.subr.mxu0 0.0
        %1356 = vmatpush1.msra.mxu0 0.0
        %1357 = vmatprep.subr.mxu0 0.0
        %1358 = vmatpush1.msra.mxu0 0.0
        %1359 = vmatprep.subr.mxu0 0.0
        %1360 = vmatpush1.msra.mxu0 0.0
        %1361 = vmatprep.subr.mxu0 0.0
        %1362 = vmatpush1.msra.mxu0 0.0
        %1363 = vmatprep.subr.mxu0 0.0
        %1364 = vmatpush1.msra.mxu0 0.0
        %1365 = vmatprep.subr.mxu0 0.0
        %1366 = vmatpush1.msra.mxu0 0.0
        %1367 = vmatprep.subr.mxu0 0.0
        %1368 = vmatpush1.msra.mxu0 0.0
        %1369 = vmatprep.subr.mxu0 0.0
        %1370 = vmatpush1.msra.mxu0 0.0
        %1371 = vmatprep.mubr.f32.mxu0 0.0
        %1372 = vmatmul.mubr.f32.gmra.mrb[0].mxu0 %v1305
        %v1373 = vpop.f32.mrb[0].mxu0
        %v1374 = vadd.f32 0.0, %v1373
        %v1375 = vpop.f32.mrb[0].mxu0
        %1376 = vdwg.mxu0
        %v1378 = vsel %vm1129, %v1220, 0
        %1380 = vmatprep.subr.mxu0 0.0
        %1381 = vmatpush1.msra.mxu0 %v365
        %1382 = vmatprep.subr.mxu0 0.0
        %1383 = vmatpush1.msra.mxu0 0.0
        %1384 = vmatprep.subr.mxu0 0.0
        %1385 = vmatpush1.msra.mxu0 0.0
        %1386 = vmatprep.subr.mxu0 0.0
        %1387 = vmatpush1.msra.mxu0 0.0
        %1388 = vmatprep.subr.mxu0 0.0
        %1389 = vmatpush1.msra.mxu0 0.0
        %1390 = vmatprep.subr.mxu0 0.0
        %1391 = vmatpush1.msra.mxu0 0.0
        %1392 = vmatprep.subr.mxu0 0.0
        %1393 = vmatpush1.msra.mxu0 0.0
        %1394 = vmatprep.subr.mxu0 0.0
        %1395 = vmatpush1.msra.mxu0 0.0
        %1396 = vmatprep.subr.mxu0 0.0
        %1397 = vmatpush1.msra.mxu0 0.0
        %1398 = vmatprep.subr.mxu0 0.0
        %1399 = vmatpush1.msra.mxu0 0.0
        %1400 = vmatprep.subr.mxu0 0.0
        %1401 = vmatpush1.msra.mxu0 0.0
        %1402 = vmatprep.subr.mxu0 0.0
        %1403 = vmatpush1.msra.mxu0 0.0
        %1404 = vmatprep.subr.mxu0 0.0
        %1405 = vmatpush1.msra.mxu0 0.0
        %1406 = vmatprep.subr.mxu0 0.0
        %1407 = vmatpush1.msra.mxu0 0.0
        %1408 = vmatprep.subr.mxu0 0.0
        %1409 = vmatpush1.msra.mxu0 0.0
        %1410 = vmatprep.subr.mxu0 0.0
        %1411 = vmatpush1.msra.mxu0 0.0
        %1412 = vmatprep.subr.mxu0 0.0
        %1413 = vmatpush1.msra.mxu0 0.0
        %1414 = vmatprep.subr.mxu0 0.0
        %1415 = vmatpush1.msra.mxu0 0.0
        %1416 = vmatprep.subr.mxu0 0.0
        %1417 = vmatpush1.msra.mxu0 0.0
        %1418 = vmatprep.subr.mxu0 0.0
        %1419 = vmatpush1.msra.mxu0 0.0
        %1420 = vmatprep.subr.mxu0 0.0
        %1421 = vmatpush1.msra.mxu0 0.0
        %1422 = vmatprep.subr.mxu0 0.0
        %1423 = vmatpush1.msra.mxu0 0.0
        %1424 = vmatprep.subr.mxu0 0.0
        %1425 = vmatpush1.msra.mxu0 0.0
        %1426 = vmatprep.subr.mxu0 0.0
        %1427 = vmatpush1.msra.mxu0 0.0
        %1428 = vmatprep.subr.mxu0 0.0
        %1429 = vmatpush1.msra.mxu0 0.0
        %1430 = vmatprep.subr.mxu0 0.0
        %1431 = vmatpush1.msra.mxu0 0.0
        %1432 = vmatprep.subr.mxu0 0.0
        %1433 = vmatpush1.msra.mxu0 0.0
        %1434 = vmatprep.subr.mxu0 0.0
        %1435 = vmatpush1.msra.mxu0 0.0
        %1436 = vmatprep.subr.mxu0 0.0
        %1437 = vmatpush1.msra.mxu0 0.0
        %1438 = vmatprep.subr.mxu0 0.0
        %1439 = vmatpush1.msra.mxu0 0.0
        %1440 = vmatprep.subr.mxu0 0.0
        %1441 = vmatpush1.msra.mxu0 0.0
        %1442 = vmatprep.subr.mxu0 0.0
        %1443 = vmatpush1.msra.mxu0 0.0
        %1444 = vmatprep.mubr.f32.mxu0 0.0
        %1445 = vmatmul.mubr.f32.gmra.mrb[0].mxu0 %v1378
        %v1446 = vpop.f32.mrb[0].mxu0
        %v1447 = vadd.f32 0.0, %v1446
        %v1448 = vpop.f32.mrb[0].mxu0
        %1449 = vdwg.mxu0
        %v1451 = vsel %vm1129, %v1222, 0
        %1453 = vmatprep.subr.mxu0 0.0
        %1454 = vmatpush1.msra.mxu0 %v366
        %1455 = vmatprep.subr.mxu0 0.0
        %1456 = vmatpush1.msra.mxu0 0.0
        %1457 = vmatprep.subr.mxu0 0.0
        %1458 = vmatpush1.msra.mxu0 0.0
        %1459 = vmatprep.subr.mxu0 0.0
        %1460 = vmatpush1.msra.mxu0 0.0
        %1461 = vmatprep.subr.mxu0 0.0
        %1462 = vmatpush1.msra.mxu0 0.0
        %1463 = vmatprep.subr.mxu0 0.0
        %1464 = vmatpush1.msra.mxu0 0.0
        %1465 = vmatprep.subr.mxu0 0.0
        %1466 = vmatpush1.msra.mxu0 0.0
        %1467 = vmatprep.subr.mxu0 0.0
        %1468 = vmatpush1.msra.mxu0 0.0
        %1469 = vmatprep.subr.mxu0 0.0
        %1470 = vmatpush1.msra.mxu0 0.0
        %1471 = vmatprep.subr.mxu0 0.0
        %1472 = vmatpush1.msra.mxu0 0.0
        %1473 = vmatprep.subr.mxu0 0.0
        %1474 = vmatpush1.msra.mxu0 0.0
        %1475 = vmatprep.subr.mxu0 0.0
        %1476 = vmatpush1.msra.mxu0 0.0
        %1477 = vmatprep.subr.mxu0 0.0
        %1478 = vmatpush1.msra.mxu0 0.0
        %1479 = vmatprep.subr.mxu0 0.0
        %1480 = vmatpush1.msra.mxu0 0.0
        %1481 = vmatprep.subr.mxu0 0.0
        %1482 = vmatpush1.msra.mxu0 0.0
        %1483 = vmatprep.subr.mxu0 0.0
        %1484 = vmatpush1.msra.mxu0 0.0
        %1485 = vmatprep.subr.mxu0 0.0
        %1486 = vmatpush1.msra.mxu0 0.0
        %1487 = vmatprep.subr.mxu0 0.0
        %1488 = vmatpush1.msra.mxu0 0.0
        %1489 = vmatprep.subr.mxu0 0.0
        %1490 = vmatpush1.msra.mxu0 0.0
        %1491 = vmatprep.subr.mxu0 0.0
        %1492 = vmatpush1.msra.mxu0 0.0
        %1493 = vmatprep.subr.mxu0 0.0
        %1494 = vmatpush1.msra.mxu0 0.0
        %1495 = vmatprep.subr.mxu0 0.0
        %1496 = vmatpush1.msra.mxu0 0.0
        %1497 = vmatprep.subr.mxu0 0.0
        %1498 = vmatpush1.msra.mxu0 0.0
        %1499 = vmatprep.subr.mxu0 0.0
        %1500 = vmatpush1.msra.mxu0 0.0
        %1501 = vmatprep.subr.mxu0 0.0
        %1502 = vmatpush1.msra.mxu0 0.0
        %1503 = vmatprep.subr.mxu0 0.0
        %1504 = vmatpush1.msra.mxu0 0.0
        %1505 = vmatprep.subr.mxu0 0.0
        %1506 = vmatpush1.msra.mxu0 0.0
        %1507 = vmatprep.subr.mxu0 0.0
        %1508 = vmatpush1.msra.mxu0 0.0
        %1509 = vmatprep.subr.mxu0 0.0
        %1510 = vmatpush1.msra.mxu0 0.0
        %1511 = vmatprep.subr.mxu0 0.0
        %1512 = vmatpush1.msra.mxu0 0.0
        %1513 = vmatprep.subr.mxu0 0.0
        %1514 = vmatpush1.msra.mxu0 0.0
        %1515 = vmatprep.subr.mxu0 0.0
        %1516 = vmatpush1.msra.mxu0 0.0
        %1517 = vmatprep.mubr.f32.mxu0 0.0
        %1518 = vmatmul.mubr.f32.gmra.mrb[0].mxu0 %v1451
        %v1519 = vpop.f32.mrb[0].mxu0
        %v1520 = vadd.f32 0.0, %v1519
        %v1521 = vpop.f32.mrb[0].mxu0
        %1522 = vdwg.mxu0
        %v1524 = vsel %vm1129, %v1224, 0
        %1526 = vmatprep.subr.mxu0 0.0
        %1527 = vmatpush1.msra.mxu0 %v367
        %1528 = vmatprep.subr.mxu0 0.0
        %1529 = vmatpush1.msra.mxu0 0.0
        %1530 = vmatprep.subr.mxu0 0.0
        %1531 = vmatpush1.msra.mxu0 0.0
        %1532 = vmatprep.subr.mxu0 0.0
        %1533 = vmatpush1.msra.mxu0 0.0
        %1534 = vmatprep.subr.mxu0 0.0
        %1535 = vmatpush1.msra.mxu0 0.0
        %1536 = vmatprep.subr.mxu0 0.0
        %1537 = vmatpush1.msra.mxu0 0.0
        %1538 = vmatprep.subr.mxu0 0.0
        %1539 = vmatpush1.msra.mxu0 0.0
        %1540 = vmatprep.subr.mxu0 0.0
        %1541 = vmatpush1.msra.mxu0 0.0
        %1542 = vmatprep.subr.mxu0 0.0
        %1543 = vmatpush1.msra.mxu0 0.0
        %1544 = vmatprep.subr.mxu0 0.0
        %1545 = vmatpush1.msra.mxu0 0.0
        %1546 = vmatprep.subr.mxu0 0.0
        %1547 = vmatpush1.msra.mxu0 0.0
        %1548 = vmatprep.subr.mxu0 0.0
        %1549 = vmatpush1.msra.mxu0 0.0
        %1550 = vmatprep.subr.mxu0 0.0
        %1551 = vmatpush1.msra.mxu0 0.0
        %1552 = vmatprep.subr.mxu0 0.0
        %1553 = vmatpush1.msra.mxu0 0.0
        %1554 = vmatprep.subr.mxu0 0.0
        %1555 = vmatpush1.msra.mxu0 0.0
        %1556 = vmatprep.subr.mxu0 0.0
        %1557 = vmatpush1.msra.mxu0 0.0
        %1558 = vmatprep.subr.mxu0 0.0
        %1559 = vmatpush1.msra.mxu0 0.0
        %1560 = vmatprep.subr.mxu0 0.0
        %1561 = vmatpush1.msra.mxu0 0.0
        %1562 = vmatprep.subr.mxu0 0.0
        %1563 = vmatpush1.msra.mxu0 0.0
        %1564 = vmatprep.subr.mxu0 0.0
        %1565 = vmatpush1.msra.mxu0 0.0
        %1566 = vmatprep.subr.mxu0 0.0
        %1567 = vmatpush1.msra.mxu0 0.0
        %1568 = vmatprep.subr.mxu0 0.0
        %1569 = vmatpush1.msra.mxu0 0.0
        %1570 = vmatprep.subr.mxu0 0.0
        %1571 = vmatpush1.msra.mxu0 0.0
        %1572 = vmatprep.subr.mxu0 0.0
        %1573 = vmatpush1.msra.mxu0 0.0
        %1574 = vmatprep.subr.mxu0 0.0
        %1575 = vmatpush1.msra.mxu0 0.0
        %1576 = vmatprep.subr.mxu0 0.0
        %1577 = vmatpush1.msra.mxu0 0.0
        %1578 = vmatprep.subr.mxu0 0.0
        %1579 = vmatpush1.msra.mxu0 0.0
        %1580 = vmatprep.subr.mxu0 0.0
        %1581 = vmatpush1.msra.mxu0 0.0
        %1582 = vmatprep.subr.mxu0 0.0
        %1583 = vmatpush1.msra.mxu0 0.0
        %1584 = vmatprep.subr.mxu0 0.0
        %1585 = vmatpush1.msra.mxu0 0.0
        %1586 = vmatprep.subr.mxu0 0.0
        %1587 = vmatpush1.msra.mxu0 0.0
        %1588 = vmatprep.subr.mxu0 0.0
        %1589 = vmatpush1.msra.mxu0 0.0
        %1590 = vmatprep.mubr.f32.mxu0 0.0
        %1591 = vmatmul.mubr.f32.gmra.mrb[0].mxu0 %v1524
        %v1592 = vpop.f32.mrb[0].mxu0
        %v1593 = vadd.f32 0.0, %v1592
        %v1594 = vpop.f32.mrb[0].mxu0
        %1595 = vdwg.mxu0
        %v1597 = vsel %vm1129, %v1226, 0
        %1599 = vmatprep.subr.mxu0 0.0
        %1600 = vmatpush1.msra.mxu0 %v368
        %1601 = vmatprep.subr.mxu0 0.0
        %1602 = vmatpush1.msra.mxu0 0.0
        %1603 = vmatprep.subr.mxu0 0.0
        %1604 = vmatpush1.msra.mxu0 0.0
        %1605 = vmatprep.subr.mxu0 0.0
        %1606 = vmatpush1.msra.mxu0 0.0
        %1607 = vmatprep.subr.mxu0 0.0
        %1608 = vmatpush1.msra.mxu0 0.0
        %1609 = vmatprep.subr.mxu0 0.0
        %1610 = vmatpush1.msra.mxu0 0.0
        %1611 = vmatprep.subr.mxu0 0.0
        %1612 = vmatpush1.msra.mxu0 0.0
        %1613 = vmatprep.subr.mxu0 0.0
        %1614 = vmatpush1.msra.mxu0 0.0
        %1615 = vmatprep.subr.mxu0 0.0
        %1616 = vmatpush1.msra.mxu0 0.0
        %1617 = vmatprep.subr.mxu0 0.0
        %1618 = vmatpush1.msra.mxu0 0.0
        %1619 = vmatprep.subr.mxu0 0.0
        %1620 = vmatpush1.msra.mxu0 0.0
        %1621 = vmatprep.subr.mxu0 0.0
        %1622 = vmatpush1.msra.mxu0 0.0
        %1623 = vmatprep.subr.mxu0 0.0
        %1624 = vmatpush1.msra.mxu0 0.0
        %1625 = vmatprep.subr.mxu0 0.0
        %1626 = vmatpush1.msra.mxu0 0.0
        %1627 = vmatprep.subr.mxu0 0.0
        %1628 = vmatpush1.msra.mxu0 0.0
        %1629 = vmatprep.subr.mxu0 0.0
        %1630 = vmatpush1.msra.mxu0 0.0
        %1631 = vmatprep.subr.mxu0 0.0
        %1632 = vmatpush1.msra.mxu0 0.0
        %1633 = vmatprep.subr.mxu0 0.0
        %1634 = vmatpush1.msra.mxu0 0.0
        %1635 = vmatprep.subr.mxu0 0.0
        %1636 = vmatpush1.msra.mxu0 0.0
        %1637 = vmatprep.subr.mxu0 0.0
        %1638 = vmatpush1.msra.mxu0 0.0
        %1639 = vmatprep.subr.mxu0 0.0
        %1640 = vmatpush1.msra.mxu0 0.0
        %1641 = vmatprep.subr.mxu0 0.0
        %1642 = vmatpush1.msra.mxu0 0.0
        %1643 = vmatprep.subr.mxu0 0.0
        %1644 = vmatpush1.msra.mxu0 0.0
        %1645 = vmatprep.subr.mxu0 0.0
        %1646 = vmatpush1.msra.mxu0 0.0
        %1647 = vmatprep.subr.mxu0 0.0
        %1648 = vmatpush1.msra.mxu0 0.0
        %1649 = vmatprep.subr.mxu0 0.0
        %1650 = vmatpush1.msra.mxu0 0.0
        %1651 = vmatprep.subr.mxu0 0.0
        %1652 = vmatpush1.msra.mxu0 0.0
        %1653 = vmatprep.subr.mxu0 0.0
        %1654 = vmatpush1.msra.mxu0 0.0
        %1655 = vmatprep.subr.mxu0 0.0
        %1656 = vmatpush1.msra.mxu0 0.0
        %1657 = vmatprep.subr.mxu0 0.0
        %1658 = vmatpush1.msra.mxu0 0.0
        %1659 = vmatprep.subr.mxu0 0.0
        %1660 = vmatpush1.msra.mxu0 0.0
        %1661 = vmatprep.subr.mxu0 0.0
        %1662 = vmatpush1.msra.mxu0 0.0
        %1663 = vmatprep.mubr.f32.mxu0 0.0
        %1664 = vmatmul.mubr.f32.gmra.mrb[0].mxu0 %v1597
        %v1665 = vpop.f32.mrb[0].mxu0
        %v1666 = vadd.f32 0.0, %v1665
        %v1667 = vpop.f32.mrb[0].mxu0
        %1668 = vdwg.mxu0
        %v1670 = vsel %vm1129, %v1228, 0
        %1672 = vmatprep.subr.mxu0 0.0
        %1673 = vmatpush1.msra.mxu0 %v369
        %1674 = vmatprep.subr.mxu0 0.0
        %1675 = vmatpush1.msra.mxu0 0.0
        %1676 = vmatprep.subr.mxu0 0.0
        %1677 = vmatpush1.msra.mxu0 0.0
        %1678 = vmatprep.subr.mxu0 0.0
        %1679 = vmatpush1.msra.mxu0 0.0
        %1680 = vmatprep.subr.mxu0 0.0
        %1681 = vmatpush1.msra.mxu0 0.0
        %1682 = vmatprep.subr.mxu0 0.0
        %1683 = vmatpush1.msra.mxu0 0.0
        %1684 = vmatprep.subr.mxu0 0.0
        %1685 = vmatpush1.msra.mxu0 0.0
        %1686 = vmatprep.subr.mxu0 0.0
        %1687 = vmatpush1.msra.mxu0 0.0
        %1688 = vmatprep.subr.mxu0 0.0
        %1689 = vmatpush1.msra.mxu0 0.0
        %1690 = vmatprep.subr.mxu0 0.0
        %1691 = vmatpush1.msra.mxu0 0.0
        %1692 = vmatprep.subr.mxu0 0.0
        %1693 = vmatpush1.msra.mxu0 0.0
        %1694 = vmatprep.subr.mxu0 0.0
        %1695 = vmatpush1.msra.mxu0 0.0
        %1696 = vmatprep.subr.mxu0 0.0
        %1697 = vmatpush1.msra.mxu0 0.0
        %1698 = vmatprep.subr.mxu0 0.0
        %1699 = vmatpush1.msra.mxu0 0.0
        %1700 = vmatprep.subr.mxu0 0.0
        %1701 = vmatpush1.msra.mxu0 0.0
        %1702 = vmatprep.subr.mxu0 0.0
        %1703 = vmatpush1.msra.mxu0 0.0
        %1704 = vmatprep.subr.mxu0 0.0
        %1705 = vmatpush1.msra.mxu0 0.0
        %1706 = vmatprep.subr.mxu0 0.0
        %1707 = vmatpush1.msra.mxu0 0.0
        %1708 = vmatprep.subr.mxu0 0.0
        %1709 = vmatpush1.msra.mxu0 0.0
        %1710 = vmatprep.subr.mxu0 0.0
        %1711 = vmatpush1.msra.mxu0 0.0
        %1712 = vmatprep.subr.mxu0 0.0
        %1713 = vmatpush1.msra.mxu0 0.0
        %1714 = vmatprep.subr.mxu0 0.0
        %1715 = vmatpush1.msra.mxu0 0.0
        %1716 = vmatprep.subr.mxu0 0.0
        %1717 = vmatpush1.msra.mxu0 0.0
        %1718 = vmatprep.subr.mxu0 0.0
        %1719 = vmatpush1.msra.mxu0 0.0
        %1720 = vmatprep.subr.mxu0 0.0
        %1721 = vmatpush1.msra.mxu0 0.0
        %1722 = vmatprep.subr.mxu0 0.0
        %1723 = vmatpush1.msra.mxu0 0.0
        %1724 = vmatprep.subr.mxu0 0.0
        %1725 = vmatpush1.msra.mxu0 0.0
        %1726 = vmatprep.subr.mxu0 0.0
        %1727 = vmatpush1.msra.mxu0 0.0
        %1728 = vmatprep.subr.mxu0 0.0
        %1729 = vmatpush1.msra.mxu0 0.0
        %1730 = vmatprep.subr.mxu0 0.0
        %1731 = vmatpush1.msra.mxu0 0.0
        %1732 = vmatprep.subr.mxu0 0.0
        %1733 = vmatpush1.msra.mxu0 0.0
        %1734 = vmatprep.subr.mxu0 0.0
        %1735 = vmatpush1.msra.mxu0 0.0
        %1736 = vmatprep.mubr.f32.mxu0 0.0
        %1737 = vmatmul.mubr.f32.gmra.mrb[0].mxu0 %v1670
        %v1738 = vpop.f32.mrb[0].mxu0
        %v1739 = vadd.f32 0.0, %v1738
        %v1740 = vpop.f32.mrb[0].mxu0
        %1741 = vdwg.mxu0
        %v1743 = vsel %vm1129, %v1230, 0
        %1745 = vmatprep.subr.mxu0 0.0
        %1746 = vmatpush1.msra.mxu0 %v370
        %1747 = vmatprep.subr.mxu0 0.0
        %1748 = vmatpush1.msra.mxu0 0.0
        %1749 = vmatprep.subr.mxu0 0.0
        %1750 = vmatpush1.msra.mxu0 0.0
        %1751 = vmatprep.subr.mxu0 0.0
        %1752 = vmatpush1.msra.mxu0 0.0
        %1753 = vmatprep.subr.mxu0 0.0
        %1754 = vmatpush1.msra.mxu0 0.0
        %1755 = vmatprep.subr.mxu0 0.0
        %1756 = vmatpush1.msra.mxu0 0.0
        %1757 = vmatprep.subr.mxu0 0.0
        %1758 = vmatpush1.msra.mxu0 0.0
        %1759 = vmatprep.subr.mxu0 0.0
        %1760 = vmatpush1.msra.mxu0 0.0
        %1761 = vmatprep.subr.mxu0 0.0
        %1762 = vmatpush1.msra.mxu0 0.0
        %1763 = vmatprep.subr.mxu0 0.0
        %1764 = vmatpush1.msra.mxu0 0.0
        %1765 = vmatprep.subr.mxu0 0.0
        %1766 = vmatpush1.msra.mxu0 0.0
        %1767 = vmatprep.subr.mxu0 0.0
        %1768 = vmatpush1.msra.mxu0 0.0
        %1769 = vmatprep.subr.mxu0 0.0
        %1770 = vmatpush1.msra.mxu0 0.0
        %1771 = vmatprep.subr.mxu0 0.0
        %1772 = vmatpush1.msra.mxu0 0.0
        %1773 = vmatprep.subr.mxu0 0.0
        %1774 = vmatpush1.msra.mxu0 0.0
        %1775 = vmatprep.subr.mxu0 0.0
        %1776 = vmatpush1.msra.mxu0 0.0
        %1777 = vmatprep.subr.mxu0 0.0
        %1778 = vmatpush1.msra.mxu0 0.0
        %1779 = vmatprep.subr.mxu0 0.0
        %1780 = vmatpush1.msra.mxu0 0.0
        %1781 = vmatprep.subr.mxu0 0.0
        %1782 = vmatpush1.msra.mxu0 0.0
        %1783 = vmatprep.subr.mxu0 0.0
        %1784 = vmatpush1.msra.mxu0 0.0
        %1785 = vmatprep.subr.mxu0 0.0
        %1786 = vmatpush1.msra.mxu0 0.0
        %1787 = vmatprep.subr.mxu0 0.0
        %1788 = vmatpush1.msra.mxu0 0.0
        %1789 = vmatprep.subr.mxu0 0.0
        %1790 = vmatpush1.msra.mxu0 0.0
        %1791 = vmatprep.subr.mxu0 0.0
        %1792 = vmatpush1.msra.mxu0 0.0
        %1793 = vmatprep.subr.mxu0 0.0
        %1794 = vmatpush1.msra.mxu0 0.0
        %1795 = vmatprep.subr.mxu0 0.0
        %1796 = vmatpush1.msra.mxu0 0.0
        %1797 = vmatprep.subr.mxu0 0.0
        %1798 = vmatpush1.msra.mxu0 0.0
        %1799 = vmatprep.subr.mxu0 0.0
        %1800 = vmatpush1.msra.mxu0 0.0
        %1801 = vmatprep.subr.mxu0 0.0
        %1802 = vmatpush1.msra.mxu0 0.0
        %1803 = vmatprep.subr.mxu0 0.0
        %1804 = vmatpush1.msra.mxu0 0.0
        %1805 = vmatprep.subr.mxu0 0.0
        %1806 = vmatpush1.msra.mxu0 0.0
        %1807 = vmatprep.subr.mxu0 0.0
        %1808 = vmatpush1.msra.mxu0 0.0
        %1809 = vmatprep.mubr.f32.mxu0 0.0
        %1810 = vmatmul.mubr.f32.gmra.mrb[0].mxu0 %v1743
        %v1811 = vpop.f32.mrb[0].mxu0
        %v1812 = vadd.f32 0.0, %v1811
        %v1813 = vpop.f32.mrb[0].mxu0
        %1814 = vdwg.mxu0
        %v1815 = vld [vmem:[#allocation8] sm:$0xff]
        %v1816 = vld [vmem:[#allocation8 + $0x8] sm:$0xff]
        %v1817 = vld [vmem:[#allocation8 + $0x10] sm:$0xff]
        %v1818 = vld [vmem:[#allocation8 + $0x18] sm:$0xff]
        %v1819 = vld [vmem:[#allocation10] sm:$0xff]
        %v1820 = vld [vmem:[#allocation10 + $0x8] sm:$0xff]
        %v1821 = vld [vmem:[#allocation10 + $0x10] sm:$0xff]
        %v1822 = vld [vmem:[#allocation10 + $0x18] sm:$0xff]
        %1823 = vmatprep.subr.mxu0 0.0
        %1824 = vmatpush1.msra.mxu0 %v1819
        %1825 = vmatprep.subr.mxu0 0.0
        %1826 = vmatpush1.msra.mxu0 %v1820
        %1827 = vmatprep.subr.mxu0 0.0
        %1828 = vmatpush1.msra.mxu0 %v1821
        %1829 = vmatprep.subr.mxu0 0.0
        %1830 = vmatpush1.msra.mxu0 %v1822
        %1831 = vmatprep.subr.mxu0 0.0
        %1832 = vmatpush1.msra.mxu0 0.0
        %1833 = vmatprep.subr.mxu0 0.0
        %1834 = vmatpush1.msra.mxu0 0.0
        %1835 = vmatprep.subr.mxu0 0.0
        %1836 = vmatpush1.msra.mxu0 0.0
        %1837 = vmatprep.subr.mxu0 0.0
        %1838 = vmatpush1.msra.mxu0 0.0
        %1839 = vmatprep.subr.mxu0 0.0
        %1840 = vmatpush1.msra.mxu0 0.0
        %1841 = vmatprep.subr.mxu0 0.0
        %1842 = vmatpush1.msra.mxu0 0.0
        %1843 = vmatprep.subr.mxu0 0.0
        %1844 = vmatpush1.msra.mxu0 0.0
        %1845 = vmatprep.subr.mxu0 0.0
        %1846 = vmatpush1.msra.mxu0 0.0
        %1847 = vmatprep.subr.mxu0 0.0
        %1848 = vmatpush1.msra.mxu0 0.0
        %1849 = vmatprep.subr.mxu0 0.0
        %1850 = vmatpush1.msra.mxu0 0.0
        %1851 = vmatprep.subr.mxu0 0.0
        %1852 = vmatpush1.msra.mxu0 0.0
        %1853 = vmatprep.subr.mxu0 0.0
        %1854 = vmatpush1.msra.mxu0 0.0
        %1855 = vmatprep.subr.mxu0 0.0
        %1856 = vmatpush1.msra.mxu0 0.0
        %1857 = vmatprep.subr.mxu0 0.0
        %1858 = vmatpush1.msra.mxu0 0.0
        %1859 = vmatprep.subr.mxu0 0.0
        %1860 = vmatpush1.msra.mxu0 0.0
        %1861 = vmatprep.subr.mxu0 0.0
        %1862 = vmatpush1.msra.mxu0 0.0
        %1863 = vmatprep.subr.mxu0 0.0
        %1864 = vmatpush1.msra.mxu0 0.0
        %1865 = vmatprep.subr.mxu0 0.0
        %1866 = vmatpush1.msra.mxu0 0.0
        %1867 = vmatprep.subr.mxu0 0.0
        %1868 = vmatpush1.msra.mxu0 0.0
        %1869 = vmatprep.subr.mxu0 0.0
        %1870 = vmatpush1.msra.mxu0 0.0
        %1871 = vmatprep.subr.mxu0 0.0
        %1872 = vmatpush1.msra.mxu0 0.0
        %1873 = vmatprep.subr.mxu0 0.0
        %1874 = vmatpush1.msra.mxu0 0.0
        %1875 = vmatprep.subr.mxu0 0.0
        %1876 = vmatpush1.msra.mxu0 0.0
        %1877 = vmatprep.subr.mxu0 0.0
        %1878 = vmatpush1.msra.mxu0 0.0
        %1879 = vmatprep.subr.mxu0 0.0
        %1880 = vmatpush1.msra.mxu0 0.0
        %1881 = vmatprep.subr.mxu0 0.0
        %1882 = vmatpush1.msra.mxu0 0.0
        %1883 = vmatprep.subr.mxu0 0.0
        %1884 = vmatpush1.msra.mxu0 0.0
        %1885 = vmatprep.subr.mxu0 0.0
        %1886 = vmatpush1.msra.mxu0 0.0
        %1887 = vmatprep.mubr.f32.mxu0 0.0
        %1888 = vmatmul.mubr.f32.gmra.mrb[0].mxu0 %v377
        %v1889 = vpop.f32.mrb[0].mxu0
        %v1890 = vadd.f32 0.0, %v1889
        %v1891 = vpop.f32.mrb[0].mxu0
        %1892 = vdwg.mxu0
        %v1901 = vrot.slane %v1374, 7
        %v1902 = vsel %vm1108, %v1901, %v1301
        %v1903 = vrot.slane %v1447, 6
        %v1904 = vsel %vm1111, %v1903, %v1902
        %v1905 = vrot.slane %v1520, 5
        %v1906 = vsel %vm1114, %v1905, %v1904
        %v1907 = vrot.slane %v1593, 4
        %v1908 = vsel %vm1117, %v1907, %v1906
        %v1909 = vrot.slane %v1666, 3
        %v1910 = vsel %vm1120, %v1909, %v1908
        %v1911 = vrot.slane %v1739, 2
        %v1912 = vsel %vm1123, %v1911, %v1910
        %v1913 = vrot.slane %v1812, 1
        %v1914 = vsel %vm1126, %v1913, %v1912
        %v1915 = vsel %vm375, %v1914, 0
        %1917 = vmatprep.subr.mxu0 0.0
        %1918 = vmatpush1.msra.mxu0 %v1815
        %1919 = vmatprep.subr.mxu0 0.0
        %1920 = vmatpush1.msra.mxu0 %v1816
        %1921 = vmatprep.subr.mxu0 0.0
        %1922 = vmatpush1.msra.mxu0 %v1817
        %1923 = vmatprep.subr.mxu0 0.0
        %1924 = vmatpush1.msra.mxu0 %v1818
        %1925 = vmatprep.subr.mxu0 0.0
        %1926 = vmatpush1.msra.mxu0 0.0
        %1927 = vmatprep.subr.mxu0 0.0
        %1928 = vmatpush1.msra.mxu0 0.0
        %1929 = vmatprep.subr.mxu0 0.0
        %1930 = vmatpush1.msra.mxu0 0.0
        %1931 = vmatprep.subr.mxu0 0.0
        %1932 = vmatpush1.msra.mxu0 0.0
        %1933 = vmatprep.subr.mxu0 0.0
        %1934 = vmatpush1.msra.mxu0 0.0
        %1935 = vmatprep.subr.mxu0 0.0
        %1936 = vmatpush1.msra.mxu0 0.0
        %1937 = vmatprep.subr.mxu0 0.0
        %1938 = vmatpush1.msra.mxu0 0.0
        %1939 = vmatprep.subr.mxu0 0.0
        %1940 = vmatpush1.msra.mxu0 0.0
        %1941 = vmatprep.subr.mxu0 0.0
        %1942 = vmatpush1.msra.mxu0 0.0
        %1943 = vmatprep.subr.mxu0 0.0
        %1944 = vmatpush1.msra.mxu0 0.0
        %1945 = vmatprep.subr.mxu0 0.0
        %1946 = vmatpush1.msra.mxu0 0.0
        %1947 = vmatprep.subr.mxu0 0.0
        %1948 = vmatpush1.msra.mxu0 0.0
        %1949 = vmatprep.subr.mxu0 0.0
        %1950 = vmatpush1.msra.mxu0 0.0
        %1951 = vmatprep.subr.mxu0 0.0
        %1952 = vmatpush1.msra.mxu0 0.0
        %1953 = vmatprep.subr.mxu0 0.0
        %1954 = vmatpush1.msra.mxu0 0.0
        %1955 = vmatprep.subr.mxu0 0.0
        %1956 = vmatpush1.msra.mxu0 0.0
        %1957 = vmatprep.subr.mxu0 0.0
        %1958 = vmatpush1.msra.mxu0 0.0
        %1959 = vmatprep.subr.mxu0 0.0
        %1960 = vmatpush1.msra.mxu0 0.0
        %1961 = vmatprep.subr.mxu0 0.0
        %1962 = vmatpush1.msra.mxu0 0.0
        %1963 = vmatprep.subr.mxu0 0.0
        %1964 = vmatpush1.msra.mxu0 0.0
        %1965 = vmatprep.subr.mxu0 0.0
        %1966 = vmatpush1.msra.mxu0 0.0
        %1967 = vmatprep.subr.mxu0 0.0
        %1968 = vmatpush1.msra.mxu0 0.0
        %1969 = vmatprep.subr.mxu0 0.0
        %1970 = vmatpush1.msra.mxu0 0.0
        %1971 = vmatprep.subr.mxu0 0.0
        %1972 = vmatpush1.msra.mxu0 0.0
        %1973 = vmatprep.subr.mxu0 0.0
        %1974 = vmatpush1.msra.mxu0 0.0
        %1975 = vmatprep.subr.mxu0 0.0
        %1976 = vmatpush1.msra.mxu0 0.0
        %1977 = vmatprep.subr.mxu0 0.0
        %1978 = vmatpush1.msra.mxu0 0.0
        %1979 = vmatprep.subr.mxu0 0.0
        %1980 = vmatpush1.msra.mxu0 0.0
        %1981 = vmatprep.mubr.f32.mxu0 0.0
        %1982 = vmatmul.mubr.f32.gmra.mrb[0].mxu0 %v1915
        %v1983 = vpop.f32.mrb[0].mxu0
        %v1984 = vadd.f32 %v1890, %v1983
        %v1985 = vpop.f32.mrb[0].mxu0
        %1986 = vdwg.mxu0
        %v1987 = vtanh.pop %v1984
        %1988 = vst.msk [vmem:[%s353] sm:$0xff] %vm375, %v1987
        %v1989 = vrot.slane %v1218, 7
        %v1990 = vsel %vm1108, %v1989, %v1216
        %v1991 = vrot.slane %v1220, 6
        %v1992 = vsel %vm1111, %v1991, %v1990
        %v1993 = vrot.slane %v1222, 5
        %v1994 = vsel %vm1114, %v1993, %v1992
        %v1995 = vrot.slane %v1224, 4
        %v1996 = vsel %vm1117, %v1995, %v1994
        %v1997 = vrot.slane %v1226, 3
        %v1998 = vsel %vm1120, %v1997, %v1996
        %v1999 = vrot.slane %v1228, 2
        %v2000 = vsel %vm1123, %v1999, %v1998
        %v2001 = vrot.slane %v1230, 1
        %v2002 = vsel %vm1126, %v2001, %v2000
        %v2004 = vsel %vm1129, %v2002, 0.0
        %2005 = vst [vmem:[%s360] sm:$0xff] %v2004
        %s2006 = sand.u32 %s154, 1
        %s2007 = scalar_lea.sflag [#allocation4], %s2006
        %s2008 = sand.u32 %s154, 1
        %s2009 = smul.addr %s2008, 8
        %s2010 = scalar_lea.vmem [#allocation11], %s2009
        %s2011 = sand.u32 %s180, 1
        %s2012 = scalar_lea.sflag [#allocation13], %s2011
        %s2013 = sand.u32 %s180, 1
        %s2014 = smul.addr %s2013, 8
        %s2015 = scalar_lea.vmem [#allocation12], %s2014
        // Predicated region
        $region61: #{tpu_custom_call.1} parent=39 // pred_check
          %p2016 = pneg %p164
        $region62: #{tpu_custom_call.1} parent=39 // pred_check_branch
          %2018 = sbr.rel (%p2016) target = $region64
        $region63: #{tpu_custom_call.1} parent=39 // pred_region
          %s2020 = ssub.s32 128, 128
          %2021 = vsyncadd %s2007, %s2020
          %s2022 = smul.addr %s31, 128
          %s2023 = scalar_lea.hbm %s5, %s2022
          %s2025 = sshll.u32 %s2010, 4
          %s2026 = int_to_ptr.vmem [resolvable:$true] %s2025
          %2028 = dma.vmem_to_hbm [thread:$0]  %s2026, 128, %s2023, %s2007
        $region64: #{tpu_custom_call.1} parent=39 // pred_fallthru
          _
        // Predicated region
        $region65: #{tpu_custom_call.1} parent=39 // pred_check
          %p2029 = pneg %p190
        $region66: #{tpu_custom_call.1} parent=39 // pred_check_branch
          %2031 = sbr.rel (%p2029) target = $region68
        $region67: #{tpu_custom_call.1} parent=39 // pred_region
          %s2033 = ssub.s32 128, 128
          %2034 = vsyncadd %s2012, %s2033
          %s2035 = smul.addr %s31, 128
          %s2036 = scalar_lea.hbm %s6, %s2035
          %s2038 = sshll.u32 %s2015, 4
          %s2039 = int_to_ptr.vmem [resolvable:$true] %s2038
          %2041 = dma.vmem_to_hbm [thread:$0]  %s2039, 128, %s2036, %s2012
        $region68: #{tpu_custom_call.1} parent=39 // pred_fallthru
          _
      $region40: #{tpu_custom_call.1} parent=5 // pred_fallthru
        _
      %p2042 = scmp.le.s32.totalorder 2, %s26
      // Predicated region
      $region69: #{tpu_custom_call.1} parent=5 // pred_check
        %p2043 = pneg %p2042
      $region70: #{tpu_custom_call.1} parent=5 // pred_check_branch
        %2045 = sbr.rel (%p2043) target = $region72
      $region71: #{tpu_custom_call.1} parent=5 // pred_region
        %s2046 = ssub.s32 %s26, 2
        // Predicated region
        $region73: #{tpu_custom_call.1} parent=71 // pred_check
          %p2047 = pneg %p170
        $region74: #{tpu_custom_call.1} parent=71 // pred_check_branch
          %2049 = sbr.rel (%p2047) target = $region76
        $region75: #{tpu_custom_call.1} parent=71 // pred_region
          %s2050 = sand.u32 %s155, 1
          %s2051 = scalar_lea.sflag [#allocation4], %s2050
          %s2052 = sand.u32 %s155, 1
          %s2053 = smul.addr %s2052, 8
          %s2054 = scalar_lea.vmem [#allocation11], %s2053
          %2055 = dma.done %s2051, 128
        $region76: #{tpu_custom_call.1} parent=71 // pred_fallthru
          _
        // Predicated region
        $region77: #{tpu_custom_call.1} parent=71 // pred_check
          %p2056 = pneg %p196
        $region78: #{tpu_custom_call.1} parent=71 // pred_check_branch
          %2058 = sbr.rel (%p2056) target = $region80
        $region79: #{tpu_custom_call.1} parent=71 // pred_region
          %s2059 = sand.u32 %s181, 1
          %s2060 = scalar_lea.sflag [#allocation13], %s2059
          %s2061 = sand.u32 %s181, 1
          %s2062 = smul.addr %s2061, 8
          %s2063 = scalar_lea.vmem [#allocation12], %s2062
          %2064 = dma.done %s2060, 128
        $region80: #{tpu_custom_call.1} parent=71 // pred_fallthru
          _
      $region72: #{tpu_custom_call.1} parent=5 // pred_fallthru
        _
    $region6: #{tpu_custom_call.1} parent=1 // loop_footer
      %s30 = sadd.s32 1, %s26
    $region7: #{tpu_custom_call.1} parent=1 // loop_footer_branch
      %25 = sbr.rel target = $region3
    $region8: #{tpu_custom_call.1} parent=1 // loop_exit
      _
    %2065 = vsyncpa [#allocation3], 1
    %s2066 = scalar_lea.sflag [#allocation3], 1
    %2067 = vsyncpa %s2066, 1
    %2068 = vsyncpa [#allocation6], 1
    %s2069 = scalar_lea.sflag [#allocation6], 1
    %2070 = vsyncpa %s2069, 1
    %2071 = vsyncpa [#allocation9], 1
    %2072 = vsyncpa [#allocation4], 1
    %s2073 = scalar_lea.sflag [#allocation4], 1
    %2074 = vsyncpa %s2073, 1
    %2075 = vsyncpa [#allocation13], 1
    %s2076 = scalar_lea.sflag [#allocation13], 1
    %2077 = vsyncpa %s2076, 1

</llo_original>
